<compile_context>
chip_gen: v6e
topology: v6e:2x2x1
jax: 0.10.0
libtpu: 0.0.40
codegen_flags: <defaults>
</compile_context>

<pallas_src>
import functools
import math

import jax
import jax.numpy as jnp
from jax import lax
from jax.experimental import pallas as pl
from jax.experimental.pallas import tpu as pltpu


# ---------------------------------------------------------------------------
# helpers
# ---------------------------------------------------------------------------

def _layer_norm(v, w, b, eps=1e-5):
    """f32 LayerNorm over the last dim (matches torch LayerNorm, eps=1e-5)."""
    mu = jnp.mean(v, axis=-1, keepdims=True)
    var = jnp.mean(jnp.square(v - mu), axis=-1, keepdims=True)
    return (v - mu) * lax.rsqrt(var + eps) * w + b


def _vmem_limit_bytes() -> int:
    """Generation-aware VMEM budget: ~75% of the core's physical VMEM."""
    default_cap = 64 * 1024 * 1024            # v7x per-TensorCore (smallest)
    try:
        info = pltpu.get_tpu_info()
        cap = int(getattr(info, "vmem_capacity_bytes", default_cap))
    except Exception:                          # narrow trace-time probe only
        cap = default_cap
    return max(32 * 1024 * 1024, (cap * 3) // 4)


def _pick_seq_tile(seq_len: int) -> int:
    if seq_len % 8 != 0 or seq_len <= 256:
        return seq_len
    for t in (256, 128, 64, 32, 16, 8):
        if seq_len % t == 0:
            return t
    return seq_len


def _pick_hidden_tile(hidden: int) -> int:
    if hidden % 128 != 0 or hidden <= 1024:
        return hidden
    for t in (1024, 512, 256, 128):
        if hidden % t == 0:
            return t
    return hidden


# ---------------------------------------------------------------------------
# attention kernel: out = x + out_proj(MHA(LN1(x)))
# ---------------------------------------------------------------------------

def _attention_kernel(x_ref, ln1_w_ref, ln1_b_ref, w_in_ref, b_in_ref,
                      w_out_t_ref, b_out_ref, o_ref,
                      *, n_head: int, mm_dtype, approx_recip: bool):
    f32 = jnp.float32
    x = x_ref[...].astype(f32)                          # (S, D)
    S, D = x.shape
    hd = D // n_head
    scale = 1.0 / math.sqrt(hd)                         # PyTorch MHA q-scaling

    h = _layer_norm(x, ln1_w_ref[...], ln1_b_ref[...])  # (S, D) f32

    # qkv^T = W_in @ h^T  (trans_b matmul: contract the D dims of both).
    qkv_t = lax.dot_general(
        w_in_ref[...], h.astype(mm_dtype),
        (((1,), (1,)), ((), ())), preferred_element_type=f32)            # (3D, S)
    qkv_t = qkv_t + b_in_ref[...]                       # (3D, 1) column broadcast

    # Head split = free leading-dim reshape; q scaled after the bias add.
    q = (qkv_t[0:D] * scale).reshape(n_head, hd, S)     # (H, hd, S)
    k = qkv_t[D:2 * D].reshape(n_head, hd, S)           # (H, hd, S)
    v = qkv_t[2 * D:3 * D].reshape(n_head, hd, S)       # (H, hd, S)

    # scores[h, i, j] = sum_d q[h, d, i] * k[h, d, j]   (S stays in lanes)
    scores = jnp.einsum("hdq,hdk->hqk",
                        q.astype(mm_dtype), k.astype(mm_dtype),
                        preferred_element_type=f32)     # (H, S, S)
    scores = scores - jnp.max(scores, axis=-1, keepdims=True)
    p = jnp.exp(scores)
    denom = jnp.sum(p, axis=-1, keepdims=True)
    probs = p * pl.reciprocal(denom, approx=approx_recip)

    # ctx^T[h, d, i] = sum_j v[h, d, j] * probs[h, i, j]
    ctx_t = jnp.einsum("hdk,hqk->hdq",
                       v.astype(mm_dtype), probs.astype(mm_dtype),
                       preferred_element_type=f32)      # (H, hd, S)
    ctx_flat = ctx_t.reshape(D, S)                      # free head collapse

    # attn[s, o] = sum_d ctx_flat[d, s] * w_out_t[d, o]  (trans_a matmul,
    # heads contracted inside the MXU; no per-head intermediate / sum).
    attn = lax.dot_general(
        ctx_flat.astype(mm_dtype), w_out_t_ref[...],
        (((0,), (0,)), ((), ())), preferred_element_type=f32)            # (S, D)

    o_ref[...] = (x + attn + b_out_ref[...]).astype(o_ref.dtype)


def _attention_call(x_bsd, params, n_head, mm_dtype, approx_recip, vmem_limit):
    B, S, D = x_bsd.shape
    f32 = jnp.float32

    ln1_w = jnp.asarray(params["ln1_w"], f32).reshape(1, D)
    ln1_b = jnp.asarray(params["ln1_b"], f32).reshape(1, D)
    w_in = jnp.asarray(params["in_w"], mm_dtype)                 # (3D, D) native
    b_in = jnp.asarray(params["in_b"], f32).reshape(3 * D, 1)    # column bias
    w_out_t = jnp.asarray(params["out_w"], mm_dtype).T           # (D_in, D_out)
    b_out = jnp.asarray(params["out_b"], f32).reshape(1, D)

    param_list = [ln1_w, ln1_b, w_in, b_in, w_out_t, b_out]

    def const_spec(arr):
        nd = arr.ndim
        return pl.BlockSpec(arr.shape, lambda b, _nd=nd: (0,) * _nd)

    in_specs = ([pl.BlockSpec((None, S, D), lambda b: (b, 0, 0))]
                + [const_spec(p) for p in param_list])
    out_spec = pl.BlockSpec((None, S, D), lambda b: (b, 0, 0))

    flops = int(B * (8 * S * D * D + 4 * S * S * D))
    transcendentals = int(B * n_head * S * S)
    bytes_accessed = int(
        sum(int(p.size) * p.dtype.itemsize for p in param_list)
        + 2 * B * S * D * x_bsd.dtype.itemsize)

    kernel = functools.partial(_attention_kernel, n_head=n_head,
                               mm_dtype=mm_dtype, approx_recip=approx_recip)
    return pl.pallas_call(
        kernel,
        out_shape=jax.ShapeDtypeStruct((B, S, D), x_bsd.dtype),
        grid_spec=pltpu.PrefetchScalarGridSpec(
            num_scalar_prefetch=0,
            grid=(B,),
            in_specs=in_specs,
            out_specs=out_spec,
        ),
        compiler_params=pltpu.CompilerParams(
            dimension_semantics=("parallel",),
            vmem_limit_bytes=vmem_limit,
        ),
        cost_estimate=pl.CostEstimate(flops=flops,
                                      transcendentals=transcendentals,
                                      bytes_accessed=bytes_accessed),
    )(x_bsd, *param_list)


# ---------------------------------------------------------------------------
# MLP kernel: out = y + c_proj(QuickGELU(c_fc(LN2(y))))   (hidden dim tiled)
# ---------------------------------------------------------------------------

def _mlp_kernel(x_ref, ln2_w_ref, ln2_b_ref, w_fc_ref, b_fc_ref,
                w_proj_ref, b_proj_ref, o_ref, h2_ref, acc_ref, *, mm_dtype):
    f32 = jnp.float32
    hstep = pl.program_id(2)

    @pl.when(hstep == 0)
    def _init():
        xv = x_ref[...].astype(f32)
        h2_ref[...] = _layer_norm(xv, ln2_w_ref[...], ln2_b_ref[...])
        acc_ref[...] = jnp.zeros_like(acc_ref)

    h2 = h2_ref[...]                                                   # (St, D) f32
    f = jnp.dot(h2.astype(mm_dtype), w_fc_ref[...],
                preferred_element_type=f32) + b_fc_ref[...]            # (St, Th)
    g = f * jax.nn.sigmoid(1.702 * f)                                  # QuickGELU f32
    acc_ref[...] += jnp.dot(g.astype(mm_dtype), w_proj_ref[...],
                            preferred_element_type=f32)                # (St, D)

    @pl.when(hstep == pl.num_programs(2) - 1)
    def _finalize():
        o_ref[...] = (x_ref[...].astype(f32) + acc_ref[...]
                      + b_proj_ref[...]).astype(o_ref.dtype)


def _mlp_call(y_bsd, params, mm_dtype, vmem_limit):
    B, S, D = y_bsd.shape
    f32 = jnp.float32
    Dh = 4 * D
    St = _pick_seq_tile(S)
    Th = _pick_hidden_tile(Dh)
    n_s = S // St
    n_h = Dh // Th

    ln2_w = jnp.asarray(params["ln2_w"], f32).reshape(1, D)
    ln2_b = jnp.asarray(params["ln2_b"], f32).reshape(1, D)
    w_fc = jnp.asarray(params["fc_w"], mm_dtype).T                # (D, 4D)
    b_fc = jnp.asarray(params["fc_b"], f32).reshape(1, Dh)
    w_proj = jnp.asarray(params["proj_w"], mm_dtype).T            # (4D, D)
    b_proj = jnp.asarray(params["proj_b"], f32).reshape(1, D)

    in_specs = [
        pl.BlockSpec((None, St, D), lambda b, s, h: (b, s, 0)),   # y
        pl.BlockSpec((1, D), lambda b, s, h: (0, 0)),             # ln2_w
        pl.BlockSpec((1, D), lambda b, s, h: (0, 0)),             # ln2_b
        pl.BlockSpec((D, Th), lambda b, s, h: (0, h)),            # w_fc tile
        pl.BlockSpec((1, Th), lambda b, s, h: (0, h)),            # b_fc tile
        pl.BlockSpec((Th, D), lambda b, s, h: (h, 0)),            # w_proj tile
        pl.BlockSpec((1, D), lambda b, s, h: (0, 0)),             # b_proj
    ]
    out_spec = pl.BlockSpec((None, St, D), lambda b, s, h: (b, s, 0))

    w_bytes = int((int(w_fc.size) + int(w_proj.size)) * w_fc.dtype.itemsize)
    flops = int(B * 16 * S * D * D)
    transcendentals = int(B * S * Dh)
    bytes_accessed = int(w_bytes * B * n_s
                         + 2 * B * S * D * y_bsd.dtype.itemsize)

    kernel = functools.partial(_mlp_kernel, mm_dtype=mm_dtype)
    return pl.pallas_call(
        kernel,
        out_shape=jax.ShapeDtypeStruct((B, S, D), y_bsd.dtype),
        grid_spec=pltpu.PrefetchScalarGridSpec(
            num_scalar_prefetch=0,
            grid=(B, n_s, n_h),
            in_specs=in_specs,
            out_specs=out_spec,
            scratch_shapes=[pltpu.VMEM((St, D), jnp.float32),     # LN2(y) cache
                            pltpu.VMEM((St, D), jnp.float32)],    # accumulator
        ),
        compiler_params=pltpu.CompilerParams(
            dimension_semantics=("parallel", "parallel", "arbitrary"),
            vmem_limit_bytes=vmem_limit,
        ),
        cost_estimate=pl.CostEstimate(flops=flops,
                                      transcendentals=transcendentals,
                                      bytes_accessed=bytes_accessed),
    )(y_bsd, ln2_w, ln2_b, w_fc, b_fc, w_proj, b_proj)


# ---------------------------------------------------------------------------
# public wrapper
# ---------------------------------------------------------------------------

def residual_attention_block(x_sbd, params, n_head, *, use_bf16_matmul=True,
                             approx_softmax_recip=None):
    """Forward of ResidualAttentionBlock.

    x_sbd: [seq_len, batch, d_model].  Returns (out [S, B, D], attn_probs=None).

    use_bf16_matmul: bf16 MXU operands with f32 accumulation — recommended on
      every TPU generation (v5e/v6e/v7x MXUs are bf16-native); halves weight
      DMA / VMEM.  Set False for an all-f32 path.
    approx_softmax_recip: use the EUP approximate reciprocal for the softmax
      normalisation (rows then sum to 1 only to ~1e-3).  Defaults to
      `use_bf16_matmul`; pass False to force exact normalisation.
    """
    S, B, D = x_sbd.shape
    assert D % n_head == 0, "d_model must be divisible by n_head"
    mm_dtype = jnp.bfloat16 if use_bf16_matmul else jnp.float32
    if approx_softmax_recip is None:
        approx_softmax_recip = bool(use_bf16_matmul)
    vmem_limit = _vmem_limit_bytes()

    x_bsd = jnp.transpose(x_sbd, (1, 0, 2))           # [B, S, D]
    y_bsd = _attention_call(x_bsd, params, n_head, mm_dtype,
                            approx_softmax_recip, vmem_limit)
    out_bsd = _mlp_call(y_bsd, params, mm_dtype, vmem_limit)
    # need_weights=False in the reference module -> attn_probs is None.
    return jnp.transpose(out_bsd, (1, 0, 2)), None


# ---------------------------------------------------------------------------
# pure-JAX reference + demo
# ---------------------------------------------------------------------------

def _reference(x_sbd, params, n_head):
    S, B, D = x_sbd.shape
    hd = D // n_head
    eps = 1e-5

    def ln(v, w, b):
        mu = v.mean(-1, keepdims=True)
        var = ((v - mu) ** 2).mean(-1, keepdims=True)
        return (v - mu) / jnp.sqrt(var + eps) * w + b

    x = x_sbd
    h = ln(x, params["ln1_w"], params["ln1_b"])
    qkv = h @ params["in_w"].T + params["in_b"]
    q, k, v = qkv[..., :D], qkv[..., D:2 * D], qkv[..., 2 * D:]
    q = q.reshape(S, B, n_head, hd).transpose(1, 2, 0, 3) / math.sqrt(hd)
    k = k.reshape(S, B, n_head, hd).transpose(1, 2, 0, 3)
    v = v.reshape(S, B, n_head, hd).transpose(1, 2, 0, 3)
    s = q @ jnp.swapaxes(k, -1, -2)
    p = jax.nn.softmax(s, axis=-1)
    a = (p @ v).transpose(2, 0, 1, 3).reshape(S, B, D)
    a = a @ params["out_w"].T + params["out_b"]
    x = x + a
    h2 = ln(x, params["ln2_w"], params["ln2_b"])
    f = h2 @ params["fc_w"].T + params["fc_b"]
    g = f * jax.nn.sigmoid(1.702 * f)
    return x + g @ params["proj_w"].T + params["proj_b"]


def _init_params(key, d_model):
    keys = jax.random.split(key, 8)
    scale = 0.05
    return {
        "ln1_w": jnp.ones((d_model,), jnp.float32),
        "ln1_b": jnp.zeros((d_model,), jnp.float32),
        "in_w": scale * jax.random.normal(keys[0], (3 * d_model, d_model), jnp.float32),
        "in_b": scale * jax.random.normal(keys[1], (3 * d_model,), jnp.float32),
        "out_w": scale * jax.random.normal(keys[2], (d_model, d_model), jnp.float32),
        "out_b": scale * jax.random.normal(keys[3], (d_model,), jnp.float32),
        "ln2_w": jnp.ones((d_model,), jnp.float32),
        "ln2_b": jnp.zeros((d_model,), jnp.float32),
        "fc_w": scale * jax.random.normal(keys[4], (4 * d_model, d_model), jnp.float32),
        "fc_b": scale * jax.random.normal(keys[5], (4 * d_model,), jnp.float32),
        "proj_w": scale * jax.random.normal(keys[6], (d_model, 4 * d_model), jnp.float32),
        "proj_b": scale * jax.random.normal(keys[7], (d_model,), jnp.float32),
    }


if __name__ == "__main__":
    seq_len, batch, d_model, n_head = 8, 2, 32, 4

    key = jax.random.PRNGKey(0)
    k_x, k_p = jax.random.split(key)
    x = jax.random.normal(k_x, (seq_len, batch, d_model), jnp.float32)
    params = _init_params(k_p, d_model)

    ref = _reference(x, params, n_head)

    # f32-operand path (tight tolerance against the f32 reference).
    out_f32, attn_probs = residual_attention_block(x, params, n_head,
                                                   use_bf16_matmul=False)
    out_f32 = jax.block_until_ready(out_f32)
    assert out_f32.shape == (seq_len, batch, d_model)
    assert attn_probs is None
    assert jnp.allclose(out_f32, ref, atol=2e-4, rtol=2e-4), "f32 path mismatch"

    # bf16-operand / f32-accumulate path (default).
    out_bf16, _ = residual_attention_block(x, params, n_head,
                                           use_bf16_matmul=True)
    out_bf16 = jax.block_until_ready(out_bf16)
    assert jnp.allclose(out_bf16, ref, atol=2e-2, rtol=2e-2), "bf16 path mismatch"

    print("KERNEL_OK")
</pallas_src>

<mosaic_0001>
module attributes {stable_mosaic.version = 11 : i64} {
  func.func @_attention_kernel(%arg0: i32, %arg1: memref<1x8x32xf32, #tpu.memory_space<vmem>>, %arg2: memref<1x32xf32, #tpu.memory_space<vmem>>, %arg3: memref<1x32xf32, #tpu.memory_space<vmem>>, %arg4: memref<96x32xf32, #tpu.memory_space<vmem>>, %arg5: memref<96x1xf32, #tpu.memory_space<vmem>>, %arg6: memref<32x32xf32, #tpu.memory_space<vmem>>, %arg7: memref<1x32xf32, #tpu.memory_space<vmem>>, %arg8: memref<1x8x32xf32, #tpu.memory_space<vmem>>) attributes {dimension_semantics = [#tpu.dimension_semantics<parallel>], iteration_bounds = array<i64: 2>, scalar_prefetch = 0 : i64, scratch_operands = 0 : i64, tpu.core_type = #tpu.core_type<tc>, window_params = [{transform_indices = @transform_0, window_bounds = array<i64: 1, 8, 32>}, {pipeline_mode = #tpu.pipeline_mode<synchronous>, transform_indices = @transform_1, window_bounds = array<i64: 1, 32>}, {pipeline_mode = #tpu.pipeline_mode<synchronous>, transform_indices = @transform_2, window_bounds = array<i64: 1, 32>}, {pipeline_mode = #tpu.pipeline_mode<synchronous>, transform_indices = @transform_3, window_bounds = array<i64: 96, 32>}, {pipeline_mode = #tpu.pipeline_mode<synchronous>, transform_indices = @transform_4, window_bounds = array<i64: 96, 1>}, {pipeline_mode = #tpu.pipeline_mode<synchronous>, transform_indices = @transform_5, window_bounds = array<i64: 32, 32>}, {pipeline_mode = #tpu.pipeline_mode<synchronous>, transform_indices = @transform_6, window_bounds = array<i64: 1, 32>}, {transform_indices = @transform_7, window_bounds = array<i64: 1, 8, 32>}]} {
    %c0 = arith.constant 0 : index
    %c0_0 = arith.constant 0 : index
    %c0_1 = arith.constant 0 : index
    %0 = vector.load %arg1[%c0, %c0_0, %c0_1] : memref<1x8x32xf32, #tpu.memory_space<vmem>>, vector<1x8x32xf32>
    %1 = vector.shape_cast %0 : vector<1x8x32xf32> to vector<8x32xf32>
    %c0_2 = arith.constant 0 : index
    %c0_3 = arith.constant 0 : index
    %2 = vector.load %arg2[%c0_2, %c0_3] : memref<1x32xf32, #tpu.memory_space<vmem>>, vector<1x32xf32>
    %c0_4 = arith.constant 0 : index
    %c0_5 = arith.constant 0 : index
    %3 = vector.load %arg3[%c0_4, %c0_5] : memref<1x32xf32, #tpu.memory_space<vmem>>, vector<1x32xf32>
    %cst = arith.constant dense<0.000000e+00> : vector<8xf32>
    %4 = vector.multi_reduction <add>, %1, %cst [1] : vector<8x32xf32> to vector<8xf32>
    %5 = vector.shape_cast %4 : vector<8xf32> to vector<8x1xf32>
    %cst_6 = arith.constant 3.200000e+01 : f32
    %6 = vector.broadcast %cst_6 : f32 to vector<8x1xf32>
    %7 = arith.divf %5, %6 : vector<8x1xf32>
    %8 = vector.broadcast %7 : vector<8x1xf32> to vector<8x32xf32>
    %9 = arith.subf %1, %8 : vector<8x32xf32>
    %10 = arith.mulf %9, %9 : vector<8x32xf32>
    %cst_7 = arith.constant dense<0.000000e+00> : vector<8xf32>
    %11 = vector.multi_reduction <add>, %10, %cst_7 [1] : vector<8x32xf32> to vector<8xf32>
    %12 = vector.shape_cast %11 : vector<8xf32> to vector<8x1xf32>
    %cst_8 = arith.constant 3.200000e+01 : f32
    %13 = vector.broadcast %cst_8 : f32 to vector<8x1xf32>
    %14 = arith.divf %12, %13 : vector<8x1xf32>
    %15 = vector.broadcast %7 : vector<8x1xf32> to vector<8x32xf32>
    %16 = arith.subf %1, %15 : vector<8x32xf32>
    %cst_9 = arith.constant 9.99999974E-6 : f32
    %17 = vector.broadcast %cst_9 : f32 to vector<8x1xf32>
    %18 = arith.addf %14, %17 : vector<8x1xf32>
    %19 = math.rsqrt %18 : vector<8x1xf32>
    %20 = vector.broadcast %19 : vector<8x1xf32> to vector<8x32xf32>
    %21 = arith.mulf %16, %20 : vector<8x32xf32>
    %22 = vector.broadcast %2 : vector<1x32xf32> to vector<8x32xf32>
    %23 = arith.mulf %21, %22 : vector<8x32xf32>
    %24 = vector.broadcast %3 : vector<1x32xf32> to vector<8x32xf32>
    %25 = arith.addf %23, %24 : vector<8x32xf32>
    %c0_10 = arith.constant 0 : index
    %c0_11 = arith.constant 0 : index
    %26 = vector.load %arg4[%c0_10, %c0_11] : memref<96x32xf32, #tpu.memory_space<vmem>>, vector<96x32xf32>
    %cst_12 = arith.constant dense<0.000000e+00> : vector<96x8xf32>
    %27 = tpu.matmul %26, %25, %cst_12 {dimension_numbers = #tpu.dot_dimension_numbers<[1], [1], [0], [0], [0, 0, 1, 0], [], []>} : vector<96x32xf32>, vector<8x32xf32>, vector<96x8xf32> -> vector<96x8xf32>
    %c0_13 = arith.constant 0 : index
    %c0_14 = arith.constant 0 : index
    %28 = vector.load %arg5[%c0_13, %c0_14] : memref<96x1xf32, #tpu.memory_space<vmem>>, vector<96x1xf32>
    %29 = vector.broadcast %28 : vector<96x1xf32> to vector<96x8xf32>
    %30 = arith.addf %27, %29 : vector<96x8xf32>
    %31 = vector.extract_strided_slice %30 {offsets = [0, 0], sizes = [32, 8], strides = [1, 1]} : vector<96x8xf32> to vector<32x8xf32>
    %cst_15 = arith.constant 0.353553385 : f32
    %32 = vector.broadcast %cst_15 : f32 to vector<32x8xf32>
    %33 = arith.mulf %31, %32 : vector<32x8xf32>
    %34 = vector.shape_cast %33 : vector<32x8xf32> to vector<4x8x8xf32>
    %35 = vector.extract_strided_slice %30 {offsets = [32, 0], sizes = [32, 8], strides = [1, 1]} : vector<96x8xf32> to vector<32x8xf32>
    %36 = vector.shape_cast %35 : vector<32x8xf32> to vector<4x8x8xf32>
    %37 = vector.extract_strided_slice %30 {offsets = [64, 0], sizes = [32, 8], strides = [1, 1]} : vector<96x8xf32> to vector<32x8xf32>
    %38 = vector.shape_cast %37 : vector<32x8xf32> to vector<4x8x8xf32>
    "tpu.trace_start"() <{level = 10 : i32, message = "hdq,hdk->hqk"}> : () -> ()
    %cst_16 = arith.constant dense<0.000000e+00> : vector<4x8x8xf32>
    %39 = tpu.matmul %34, %36, %cst_16 {dimension_numbers = #tpu.dot_dimension_numbers<[1], [1], [2], [2], [0, 0, 0, 2, 1, 2], [0], [0]>} : vector<4x8x8xf32>, vector<4x8x8xf32>, vector<4x8x8xf32> -> vector<4x8x8xf32>
    "tpu.trace_stop"() : () -> ()
    %cst_17 = arith.constant dense<0xFF800000> : vector<4x8xf32>
    %40 = vector.multi_reduction <maximumf>, %39, %cst_17 [2] : vector<4x8x8xf32> to vector<4x8xf32>
    %41 = vector.shape_cast %40 : vector<4x8xf32> to vector<4x8x1xf32>
    %42 = vector.broadcast %41 : vector<4x8x1xf32> to vector<4x8x8xf32>
    %43 = arith.subf %39, %42 : vector<4x8x8xf32>
    %44 = math.exp %43 : vector<4x8x8xf32>
    %cst_18 = arith.constant dense<0.000000e+00> : vector<4x8xf32>
    %45 = vector.multi_reduction <add>, %44, %cst_18 [2] : vector<4x8x8xf32> to vector<4x8xf32>
    %46 = vector.shape_cast %45 : vector<4x8xf32> to vector<4x8x1xf32>
    %47 = tpu.reciprocal %46 : vector<4x8x1xf32> -> vector<4x8x1xf32>
    %48 = vector.broadcast %47 : vector<4x8x1xf32> to vector<4x8x8xf32>
    %49 = arith.mulf %44, %48 : vector<4x8x8xf32>
    "tpu.trace_start"() <{level = 10 : i32, message = "hdk,hqk->hdq"}> : () -> ()
    %cst_19 = arith.constant dense<0.000000e+00> : vector<4x8x8xf32>
    %50 = tpu.matmul %38, %49, %cst_19 {dimension_numbers = #tpu.dot_dimension_numbers<[2], [2], [1], [1], [0, 0, 0, 1, 1, 1], [0], [0]>} : vector<4x8x8xf32>, vector<4x8x8xf32>, vector<4x8x8xf32> -> vector<4x8x8xf32>
    "tpu.trace_stop"() : () -> ()
    %51 = vector.shape_cast %50 : vector<4x8x8xf32> to vector<32x8xf32>
    %c0_20 = arith.constant 0 : index
    %c0_21 = arith.constant 0 : index
    %52 = vector.load %arg6[%c0_20, %c0_21] : memref<32x32xf32, #tpu.memory_space<vmem>>, vector<32x32xf32>
    %cst_22 = arith.constant dense<0.000000e+00> : vector<8x32xf32>
    %53 = tpu.matmul %51, %52, %cst_22 {dimension_numbers = #tpu.dot_dimension_numbers<[0], [0], [1], [1], [0, 1, 1, 1], [], []>} : vector<32x8xf32>, vector<32x32xf32>, vector<8x32xf32> -> vector<8x32xf32>
    %54 = arith.addf %1, %53 : vector<8x32xf32>
    %c0_23 = arith.constant 0 : index
    %c0_24 = arith.constant 0 : index
    %55 = vector.load %arg7[%c0_23, %c0_24] : memref<1x32xf32, #tpu.memory_space<vmem>>, vector<1x32xf32>
    %56 = vector.broadcast %55 : vector<1x32xf32> to vector<8x32xf32>
    %57 = arith.addf %54, %56 : vector<8x32xf32>
    %c0_25 = arith.constant 0 : index
    %c0_26 = arith.constant 0 : index
    %c0_27 = arith.constant 0 : index
    %58 = vector.load %arg8[%c0_25, %c0_26, %c0_27] : memref<1x8x32xf32, #tpu.memory_space<vmem>>, vector<1x8x32xf32>
    %59 = vector.shape_cast %58 : vector<1x8x32xf32> to vector<8x32xf32>
    %60 = vector.shape_cast %57 : vector<8x32xf32> to vector<1x8x32xf32>
    tpu.vector_store %arg8[%c0_25, %c0_26, %c0_27], %60 {strides = array<i32>} : memref<1x8x32xf32, #tpu.memory_space<vmem>>, vector<1x8x32xf32>,
    return
  }
  func.func @transform_0(%arg0: i32) -> (i32, i32, i32) {
    %c0_i32 = arith.constant 0 : i32
    %c0_i32_0 = arith.constant 0 : i32
    %c0_i32_1 = arith.constant 0 : i32
    return %arg0, %c0_i32, %c0_i32_0 : i32, i32, i32
  }
  func.func @transform_1(%arg0: i32) -> (i32, i32) {
    %c0_i32 = arith.constant 0 : i32
    %c0_i32_0 = arith.constant 0 : i32
    %c0_i32_1 = arith.constant 0 : i32
    return %c0_i32, %c0_i32_0 : i32, i32
  }
  func.func @transform_2(%arg0: i32) -> (i32, i32) {
    %c0_i32 = arith.constant 0 : i32
    %c0_i32_0 = arith.constant 0 : i32
    %c0_i32_1 = arith.constant 0 : i32
    return %c0_i32, %c0_i32_0 : i32, i32
  }
  func.func @transform_3(%arg0: i32) -> (i32, i32) {
    %c0_i32 = arith.constant 0 : i32
    %c0_i32_0 = arith.constant 0 : i32
    %c0_i32_1 = arith.constant 0 : i32
    return %c0_i32, %c0_i32_0 : i32, i32
  }
  func.func @transform_4(%arg0: i32) -> (i32, i32) {
    %c0_i32 = arith.constant 0 : i32
    %c0_i32_0 = arith.constant 0 : i32
    %c0_i32_1 = arith.constant 0 : i32
    return %c0_i32, %c0_i32_0 : i32, i32
  }
  func.func @transform_5(%arg0: i32) -> (i32, i32) {
    %c0_i32 = arith.constant 0 : i32
    %c0_i32_0 = arith.constant 0 : i32
    %c0_i32_1 = arith.constant 0 : i32
    return %c0_i32, %c0_i32_0 : i32, i32
  }
  func.func @transform_6(%arg0: i32) -> (i32, i32) {
    %c0_i32 = arith.constant 0 : i32
    %c0_i32_0 = arith.constant 0 : i32
    %c0_i32_1 = arith.constant 0 : i32
    return %c0_i32, %c0_i32_0 : i32, i32
  }
  func.func @transform_7(%arg0: i32) -> (i32, i32, i32) {
    %c0_i32 = arith.constant 0 : i32
    %c0_i32_0 = arith.constant 0 : i32
    %c0_i32_1 = arith.constant 0 : i32
    return %arg0, %c0_i32, %c0_i32_0 : i32, i32, i32
  }
}

</mosaic_0001>

<llo_original>
// kernel: tpu_custom_call.1
$region0: #{tpu_custom_call.1}
  #allocation0 [shape = 'u32[]', space=smem, size = 0x4, offset = 0x4, fixed_abs, tag = 'smem constant byte address 0x4 - core index']
  #allocation1 [shape = 'u32[144,128]{1,0:T(1,128)}', space=vmem, size = 0x12000, scoped, tag = 'internal scratch']
  %s0 = inlined_call_operand.vmem [shape: f32[2,8,32], index: 0, kind: input, shape index: {}]
  %s1 = inlined_call_operand.vmem [shape: f32[1,32], index: 1, kind: input, shape index: {}]
  %s2 = inlined_call_operand.vmem [shape: f32[1,32], index: 2, kind: input, shape index: {}]
  %s3 = inlined_call_operand.vmem [shape: f32[96,32], index: 3, kind: input, shape index: {}]
  %s4 = inlined_call_operand.vmem [shape: f32[96,1], index: 4, kind: input, shape index: {}]
  %s5 = inlined_call_operand.vmem [shape: f32[32,32], index: 5, kind: input, shape index: {}]
  %s6 = inlined_call_operand.vmem [shape: f32[1,32], index: 6, kind: input, shape index: {}]
  %s7 = inlined_call_operand.hbm [shape: f32[2,8,32], index: 7, kind: output, shape index: {}]
  %s8 = sld [smem:[#allocation0]]
  $region61: #{tpu_custom_call.1} parent=0
    _
  %s10 = ssub.s32 1, %s8
  %s11 = scalar_select 0, %s10, %s8
  $region1: #{tpu_custom_call.1} parent=0
    #allocation2 [shape = 'u8[8192]{0}', space=vmem, size = 0x2000, scoped, tag = 'output window, operand 0']
    #allocation3 [shape = 's32[2]{0}', space=sflag, size = 0x8, scoped, tag = 'scoped memory for tpu_custom_call.1']
    %12 = vsyncpa [#allocation3], 0
    %s13 = scalar_lea.sflag [#allocation3], 1
    %14 = vsyncpa %s13, 0
    loop: start=0, step=1, limit=4
    $region2: #{tpu_custom_call.1} parent=1 // loop_pre_header
      _
    $region3: #{tpu_custom_call.1} parent=1 // loop_header
      %s16 = sphi 0, %s20
      %p17 = scmp.ge.s32.totalorder %s16, 4
      %s26 = sphi 0, %s28
      %s29 = sphi 0, %s26
      %s30 = sphi 0, %s29
      %s46 = sphi 0, %s30
      %s50 = sphi 0, %s50
      %s52 = sphi 0, %s50
      %s53 = sphi 0, %s52
      %s67 = sphi 0, %s53
      %s71 = sphi 0, %s71
      %s73 = sphi 0, %s71
      %s74 = sphi 0, %s73
      %s88 = sphi 0, %s74
      %s92 = sphi 0, %s92
      %s94 = sphi 0, %s92
      %s95 = sphi 0, %s94
      %s109 = sphi 0, %s95
      %s113 = sphi 0, %s113
      %s115 = sphi 0, %s113
      %s116 = sphi 0, %s115
      %s130 = sphi 0, %s116
      %s134 = sphi 0, %s134
      %s136 = sphi 0, %s134
      %s137 = sphi 0, %s136
      %s151 = sphi 0, %s137
      %s155 = sphi 0, %s155
      %s157 = sphi 0, %s155
      %s158 = sphi 0, %s157
      %s172 = sphi 0, %s158
      %s178 = sphi 0, %s180
      %s181 = sphi 0, %s178
      %s182 = sphi 0, %s181
      %s198 = sphi 0, %s182
    $region4: #{tpu_custom_call.1} parent=1 // loop_header_branch
      %19 = sbr.rel (%p17) target = $region8
    $region5: #{tpu_custom_call.1} parent=1 // loop_body
      %s21 = ssub.s32 %s16, 1
      %s22 = ssub.s32 %s16, 2
      %s23 = sadd.s32 %s16, 1
      %s24 = ssub.s32 %s16, %s23
      %p25 = scmp.eq.s32.totalorder %s24, 0
      %s27 = sadd.s32 %s26, 1
      %s28 = scalar_select %p25, %s26, %s27
      %p31 = pneg %p25
      %p32 = scmp.eq.s32.totalorder %s16, 1
      %p33 = por %p31, %p32
      %p34 = scmp.ne.s32.totalorder %s26, %s29
      %p35 = scmp.eq.s32.totalorder %s16, 0
      %p36 = por %p34, %p35
      %p37 = scmp.ne.s32.totalorder %s26, %s29
      %p38 = scmp.eq.s32.totalorder %s21, 1
      %p39 = por %p37, %p38
      %p40 = scmp.ne.s32.totalorder %s29, %s30
      %p41 = scmp.eq.s32.totalorder %s21, 0
      %p42 = por %p40, %p41
      %p43 = scmp.ne.s32.totalorder %s29, %s30
      %p44 = scmp.eq.s32.totalorder %s22, 1
      %p45 = por %p43, %p44
      %p47 = scmp.ne.s32.totalorder %s30, %s46
      %p48 = scmp.eq.s32.totalorder %s22, 0
      %p49 = por %p47, %p48
      %s51 = sadd.s32 %s50, 1
      %p54 = scmp.eq.s32.totalorder %s16, 1
      %p55 = scmp.ne.s32.totalorder %s50, %s52
      %p56 = scmp.eq.s32.totalorder %s16, 0
      %p57 = por %p55, %p56
      %p58 = scmp.ne.s32.totalorder %s50, %s52
      %p59 = scmp.eq.s32.totalorder %s21, 1
      %p60 = por %p58, %p59
      %p61 = scmp.ne.s32.totalorder %s52, %s53
      %p62 = scmp.eq.s32.totalorder %s21, 0
      %p63 = por %p61, %p62
      %p64 = scmp.ne.s32.totalorder %s52, %s53
      %p65 = scmp.eq.s32.totalorder %s22, 1
      %p66 = por %p64, %p65
      %p68 = scmp.ne.s32.totalorder %s53, %s67
      %p69 = scmp.eq.s32.totalorder %s22, 0
      %p70 = por %p68, %p69
      %s72 = sadd.s32 %s71, 1
      %p75 = scmp.eq.s32.totalorder %s16, 1
      %p76 = scmp.ne.s32.totalorder %s71, %s73
      %p77 = scmp.eq.s32.totalorder %s16, 0
      %p78 = por %p76, %p77
      %p79 = scmp.ne.s32.totalorder %s71, %s73
      %p80 = scmp.eq.s32.totalorder %s21, 1
      %p81 = por %p79, %p80
      %p82 = scmp.ne.s32.totalorder %s73, %s74
      %p83 = scmp.eq.s32.totalorder %s21, 0
      %p84 = por %p82, %p83
      %p85 = scmp.ne.s32.totalorder %s73, %s74
      %p86 = scmp.eq.s32.totalorder %s22, 1
      %p87 = por %p85, %p86
      %p89 = scmp.ne.s32.totalorder %s74, %s88
      %p90 = scmp.eq.s32.totalorder %s22, 0
      %p91 = por %p89, %p90
      %s93 = sadd.s32 %s92, 1
      %p96 = scmp.eq.s32.totalorder %s16, 1
      %p97 = scmp.ne.s32.totalorder %s92, %s94
      %p98 = scmp.eq.s32.totalorder %s16, 0
      %p99 = por %p97, %p98
      %p100 = scmp.ne.s32.totalorder %s92, %s94
      %p101 = scmp.eq.s32.totalorder %s21, 1
      %p102 = por %p100, %p101
      %p103 = scmp.ne.s32.totalorder %s94, %s95
      %p104 = scmp.eq.s32.totalorder %s21, 0
      %p105 = por %p103, %p104
      %p106 = scmp.ne.s32.totalorder %s94, %s95
      %p107 = scmp.eq.s32.totalorder %s22, 1
      %p108 = por %p106, %p107
      %p110 = scmp.ne.s32.totalorder %s95, %s109
      %p111 = scmp.eq.s32.totalorder %s22, 0
      %p112 = por %p110, %p111
      %s114 = sadd.s32 %s113, 1
      %p117 = scmp.eq.s32.totalorder %s16, 1
      %p118 = scmp.ne.s32.totalorder %s113, %s115
      %p119 = scmp.eq.s32.totalorder %s16, 0
      %p120 = por %p118, %p119
      %p121 = scmp.ne.s32.totalorder %s113, %s115
      %p122 = scmp.eq.s32.totalorder %s21, 1
      %p123 = por %p121, %p122
      %p124 = scmp.ne.s32.totalorder %s115, %s116
      %p125 = scmp.eq.s32.totalorder %s21, 0
      %p126 = por %p124, %p125
      %p127 = scmp.ne.s32.totalorder %s115, %s116
      %p128 = scmp.eq.s32.totalorder %s22, 1
      %p129 = por %p127, %p128
      %p131 = scmp.ne.s32.totalorder %s116, %s130
      %p132 = scmp.eq.s32.totalorder %s22, 0
      %p133 = por %p131, %p132
      %s135 = sadd.s32 %s134, 1
      %p138 = scmp.eq.s32.totalorder %s16, 1
      %p139 = scmp.ne.s32.totalorder %s134, %s136
      %p140 = scmp.eq.s32.totalorder %s16, 0
      %p141 = por %p139, %p140
      %p142 = scmp.ne.s32.totalorder %s134, %s136
      %p143 = scmp.eq.s32.totalorder %s21, 1
      %p144 = por %p142, %p143
      %p145 = scmp.ne.s32.totalorder %s136, %s137
      %p146 = scmp.eq.s32.totalorder %s21, 0
      %p147 = por %p145, %p146
      %p148 = scmp.ne.s32.totalorder %s136, %s137
      %p149 = scmp.eq.s32.totalorder %s22, 1
      %p150 = por %p148, %p149
      %p152 = scmp.ne.s32.totalorder %s137, %s151
      %p153 = scmp.eq.s32.totalorder %s22, 0
      %p154 = por %p152, %p153
      %s156 = sadd.s32 %s155, 1
      %p159 = scmp.eq.s32.totalorder %s16, 1
      %p160 = scmp.ne.s32.totalorder %s155, %s157
      %p161 = scmp.eq.s32.totalorder %s16, 0
      %p162 = por %p160, %p161
      %p163 = scmp.ne.s32.totalorder %s155, %s157
      %p164 = scmp.eq.s32.totalorder %s21, 1
      %p165 = por %p163, %p164
      %p166 = scmp.ne.s32.totalorder %s157, %s158
      %p167 = scmp.eq.s32.totalorder %s21, 0
      %p168 = por %p166, %p167
      %p169 = scmp.ne.s32.totalorder %s157, %s158
      %p170 = scmp.eq.s32.totalorder %s22, 1
      %p171 = por %p169, %p170
      %p173 = scmp.ne.s32.totalorder %s158, %s172
      %p174 = scmp.eq.s32.totalorder %s22, 0
      %p175 = por %p173, %p174
      %s176 = ssub.s32 %s16, %s23
      %p177 = scmp.eq.s32.totalorder %s176, 0
      %s179 = sadd.s32 %s178, 1
      %s180 = scalar_select %p177, %s178, %s179
      %p183 = pneg %p177
      %p184 = scmp.eq.s32.totalorder %s16, 1
      %p185 = por %p183, %p184
      %p186 = scmp.ne.s32.totalorder %s178, %s181
      %p187 = scmp.eq.s32.totalorder %s16, 0
      %p188 = por %p186, %p187
      %p189 = scmp.ne.s32.totalorder %s178, %s181
      %p190 = scmp.eq.s32.totalorder %s21, 1
      %p191 = por %p189, %p190
      %p192 = scmp.ne.s32.totalorder %s181, %s182
      %p193 = scmp.eq.s32.totalorder %s21, 0
      %p194 = por %p192, %p193
      %p195 = scmp.ne.s32.totalorder %s181, %s182
      %p196 = scmp.eq.s32.totalorder %s22, 1
      %p197 = por %p195, %p196
      %p199 = scmp.ne.s32.totalorder %s182, %s198
      %p200 = scmp.eq.s32.totalorder %s22, 0
      %p201 = por %p199, %p200
      %p202 = scmp.le.s32.totalorder 1, %s16
      %p203 = scmp.lt.s32.totalorder %s16, 3
      %p204 = pnand %p202, %p203
      %p205 = pneg %p204
      // Predicated region
      $region9: #{tpu_custom_call.1} parent=5 // pred_check
        _
      $region10: #{tpu_custom_call.1} parent=5 // pred_check_branch
        %207 = sbr.rel (%p204) target = $region12
      $region11: #{tpu_custom_call.1} parent=5 // pred_region
        %s208 = ssub.s32 %s16, 1
        // Predicated region
        $region13: #{tpu_custom_call.1} parent=11 // pred_check
          %p209 = pneg %p63
        $region14: #{tpu_custom_call.1} parent=11 // pred_check_branch
          %211 = sbr.rel (%p209) target = $region16
        $region15: #{tpu_custom_call.1} parent=11 // pred_region
          _
        $region16: #{tpu_custom_call.1} parent=11 // pred_fallthru
          _
        // Predicated region
        $region17: #{tpu_custom_call.1} parent=11 // pred_check
          %p212 = pneg %p84
        $region18: #{tpu_custom_call.1} parent=11 // pred_check_branch
          %214 = sbr.rel (%p212) target = $region20
        $region19: #{tpu_custom_call.1} parent=11 // pred_region
          _
        $region20: #{tpu_custom_call.1} parent=11 // pred_fallthru
          _
        // Predicated region
        $region21: #{tpu_custom_call.1} parent=11 // pred_check
          %p215 = pneg %p105
        $region22: #{tpu_custom_call.1} parent=11 // pred_check_branch
          %217 = sbr.rel (%p215) target = $region24
        $region23: #{tpu_custom_call.1} parent=11 // pred_region
          _
        $region24: #{tpu_custom_call.1} parent=11 // pred_fallthru
          _
        // Predicated region
        $region25: #{tpu_custom_call.1} parent=11 // pred_check
          %p218 = pneg %p126
        $region26: #{tpu_custom_call.1} parent=11 // pred_check_branch
          %220 = sbr.rel (%p218) target = $region28
        $region27: #{tpu_custom_call.1} parent=11 // pred_region
          _
        $region28: #{tpu_custom_call.1} parent=11 // pred_fallthru
          _
        // Predicated region
        $region29: #{tpu_custom_call.1} parent=11 // pred_check
          %p221 = pneg %p147
        $region30: #{tpu_custom_call.1} parent=11 // pred_check_branch
          %223 = sbr.rel (%p221) target = $region32
        $region31: #{tpu_custom_call.1} parent=11 // pred_region
          _
        $region32: #{tpu_custom_call.1} parent=11 // pred_fallthru
          _
        // Predicated region
        $region33: #{tpu_custom_call.1} parent=11 // pred_check
          %p224 = pneg %p168
        $region34: #{tpu_custom_call.1} parent=11 // pred_check_branch
          %226 = sbr.rel (%p224) target = $region36
        $region35: #{tpu_custom_call.1} parent=11 // pred_region
          _
        $region36: #{tpu_custom_call.1} parent=11 // pred_fallthru
          _
      $region12: #{tpu_custom_call.1} parent=5 // pred_fallthru
        _
      %p227 = scmp.lt.s32.totalorder %s16, 2
      // Predicated region
      $region37: #{tpu_custom_call.1} parent=5 // pred_check
        %p228 = pneg %p227
      $region38: #{tpu_custom_call.1} parent=5 // pred_check_branch
        %230 = sbr.rel (%p228) target = $region40
      $region39: #{tpu_custom_call.1} parent=5 // pred_region
        // Predicated region
        $region41: #{tpu_custom_call.1} parent=39 // pred_check
          %p231 = pneg %p36
        $region42: #{tpu_custom_call.1} parent=39 // pred_check_branch
          %233 = sbr.rel (%p231) target = $region44
        $region43: #{tpu_custom_call.1} parent=39 // pred_region
          %p234 = scmp.lt.s32.totalorder %s16, 1
          %s235 = scalar_select %p234, %s16, 1
          %s236 = smul.addr %s235, 8
          %s237 = scalar_lea.vmem %s0, %s236
        $region44: #{tpu_custom_call.1} parent=39 // pred_fallthru
          _
      $region40: #{tpu_custom_call.1} parent=5 // pred_fallthru
        _
      %p238 = scmp.le.s32.totalorder 1, %s16
      %p239 = scmp.lt.s32.totalorder %s16, 3
      %p240 = pnand %p238, %p239
      %p241 = pneg %p240
      // Predicated region
      $region45: #{tpu_custom_call.1} parent=5 // pred_check
        _
      $region46: #{tpu_custom_call.1} parent=5 // pred_check_branch
        %243 = sbr.rel (%p240) target = $region48
      $region47: #{tpu_custom_call.1} parent=5 // pred_region
        %s244 = ssub.s32 %s16, 1
        %p245 = scmp.lt.s32.totalorder %s21, 1
        %s246 = scalar_select %p245, %s21, 1
        %s247 = smul.addr %s246, 8
        %s248 = scalar_lea.vmem %s0, %s247
        %p249 = pneg %p42
        %p250 = pneg %p39
        %p251 = pneg %p63
        %p252 = pneg %p60
        %p253 = pneg %p84
        %p254 = pneg %p81
        %p255 = pneg %p105
        %p256 = pneg %p102
        %p257 = pneg %p126
        %p258 = pneg %p123
        %p259 = pneg %p147
        %p260 = pneg %p144
        %p261 = pneg %p168
        %p262 = pneg %p165
        %p263 = pneg %p194
        %p264 = pneg %p191
        %s265 = sand.u32 %s181, 1
        %s266 = scalar_lea.sflag [#allocation3], %s265
        %s267 = sand.u32 %s181, 1
        %s268 = smul.addr %s267, 8
        %s269 = scalar_lea.vmem [#allocation2], %s268
        %p270 = scmp.lt.s32.totalorder %s21, 1
        %s271 = scalar_select %p270, %s21, 1
        %s272 = smul.addr %s271, 8
        %s273 = scalar_lea.vmem %s0, %s272
        %v274 = vld [vmem:[%s273] sm:$0xff]
        %v275 = vld [vmem:[%s1] sm:$0x1]
        %v276 = vld [vmem:[%s2] sm:$0x1]
        %vm277 = vcmask 261120
        %v278 = vsel %vm277, %v274, 0.0
        %279 = vadd.xlane.f32.xlu0 %v278
        %v280 = vpop.xlane.xlu0 %279
        %v281 = vrcp.pop 32.0
        %v282 = vmul.f32 %v280, %v281
        %v283 = vsub.f32 %v274, %v282
        %v284 = vmul.f32 %v283, %v283
        %v285 = vsel %vm277, %v284, 0.0
        %286 = vadd.xlane.f32.xlu0 %v285
        %v287 = vpop.xlane.xlu0 %286
        %v288 = vmul.f32 %v287, %v281
        %v289 = vadd.f32 %v288, 1e-05
        %v290 = vrsqrt.pop %v289
        %v291 = vmul.f32 %v283, %v290
        %v293 = vlaneseq
        %v294 = vshrl.u32 %v293, 7
        %v295 = vsub.s32 0, %v294
        %v296 = vrot.slane %v275, %v295
        %v298 = vmul.f32 %v291, %v296
        %v300 = vlaneseq
        %v301 = vshrl.u32 %v300, 7
        %v302 = vsub.s32 0, %v301
        %v303 = vrot.slane %v276, %v302
        %v305 = vadd.f32 %v298, %v303
        %v306 = vld [vmem:[%s3] sm:$0xff]
        %v307 = vld [vmem:[%s3 + $0x8] sm:$0xff]
        %v308 = vld [vmem:[%s3 + $0x10] sm:$0xff]
        %v309 = vld [vmem:[%s3 + $0x18] sm:$0xff]
        %v310 = vld [vmem:[%s3 + $0x20] sm:$0xff]
        %v311 = vld [vmem:[%s3 + $0x28] sm:$0xff]
        %v312 = vld [vmem:[%s3 + $0x30] sm:$0xff]
        %v313 = vld [vmem:[%s3 + $0x38] sm:$0xff]
        %v314 = vld [vmem:[%s3 + $0x40] sm:$0xff]
        %v315 = vld [vmem:[%s3 + $0x48] sm:$0xff]
        %v316 = vld [vmem:[%s3 + $0x50] sm:$0xff]
        %v317 = vld [vmem:[%s3 + $0x58] sm:$0xff]
        %v318 = vld [vmem:[%s4] sm:$0xff]
        %v319 = vld [vmem:[%s4 + $0x8] sm:$0xff]
        %v320 = vld [vmem:[%s4 + $0x10] sm:$0xff]
        %v321 = vld [vmem:[%s4 + $0x18] sm:$0xff]
        %v322 = vld [vmem:[%s4 + $0x20] sm:$0xff]
        %v323 = vld [vmem:[%s4 + $0x28] sm:$0xff]
        %v324 = vld [vmem:[%s4 + $0x30] sm:$0xff]
        %v325 = vld [vmem:[%s4 + $0x38] sm:$0xff]
        %v326 = vld [vmem:[%s4 + $0x40] sm:$0xff]
        %v327 = vld [vmem:[%s4 + $0x48] sm:$0xff]
        %v328 = vld [vmem:[%s4 + $0x50] sm:$0xff]
        %v329 = vld [vmem:[%s4 + $0x58] sm:$0xff]
        %331 = vset.pattern.permute.xlu0 0
        %332 = vperm.xlu0 %331, %v318
        %v333 = vpop.permute.xlu0 %332
        %336 = vset.pattern.permute.xlu0 0
        %337 = vperm.xlu0 %336, %v319
        %v338 = vpop.permute.xlu0 %337
        %341 = vset.pattern.permute.xlu0 0
        %342 = vperm.xlu0 %341, %v320
        %v343 = vpop.permute.xlu0 %342
        %346 = vset.pattern.permute.xlu0 0
        %347 = vperm.xlu0 %346, %v321
        %v348 = vpop.permute.xlu0 %347
        %351 = vset.pattern.permute.xlu0 0
        %352 = vperm.xlu0 %351, %v322
        %v353 = vpop.permute.xlu0 %352
        %356 = vset.pattern.permute.xlu0 0
        %357 = vperm.xlu0 %356, %v323
        %v358 = vpop.permute.xlu0 %357
        %361 = vset.pattern.permute.xlu0 0
        %362 = vperm.xlu0 %361, %v324
        %v363 = vpop.permute.xlu0 %362
        %366 = vset.pattern.permute.xlu0 0
        %367 = vperm.xlu0 %366, %v325
        %v368 = vpop.permute.xlu0 %367
        %371 = vset.pattern.permute.xlu0 0
        %372 = vperm.xlu0 %371, %v326
        %v373 = vpop.permute.xlu0 %372
        %376 = vset.pattern.permute.xlu0 0
        %377 = vperm.xlu0 %376, %v327
        %v378 = vpop.permute.xlu0 %377
        %381 = vset.pattern.permute.xlu0 0
        %382 = vperm.xlu0 %381, %v328
        %v383 = vpop.permute.xlu0 %382
        %386 = vset.pattern.permute.xlu0 0
        %387 = vperm.xlu0 %386, %v329
        %v388 = vpop.permute.xlu0 %387
        %v391 = vsel %vm277, %v306, 0
        %v394 = vsel %vm277, %v307, 0
        %v397 = vsel %vm277, %v308, 0
        %v400 = vsel %vm277, %v309, 0
        %v403 = vsel %vm277, %v310, 0
        %v406 = vsel %vm277, %v311, 0
        %v409 = vsel %vm277, %v312, 0
        %v412 = vsel %vm277, %v313, 0
        %v415 = vsel %vm277, %v314, 0
        %v418 = vsel %vm277, %v315, 0
        %v421 = vsel %vm277, %v316, 0
        %v424 = vsel %vm277, %v317, 0
        %v427 = vsel %vm277, %v305, 0
        %429 = vmatprep.subr.mxu0 0.0
        %430 = vmatpush1.xpose.msra.mxu0 0.0
        %431 = vmatprep.subr.mxu0 0.0
        %432 = vmatpush1.xpose.msra.mxu0 0.0
        %433 = vmatprep.subr.mxu0 0.0
        %434 = vmatpush1.xpose.msra.mxu0 0.0
        %435 = vmatprep.subr.mxu0 0.0
        %436 = vmatpush1.xpose.msra.mxu0 0.0
        %437 = vmatprep.subr.mxu0 0.0
        %438 = vmatpush1.xpose.msra.mxu0 0.0
        %439 = vmatprep.subr.mxu0 0.0
        %440 = vmatpush1.xpose.msra.mxu0 0.0
        %441 = vmatprep.subr.mxu0 0.0
        %442 = vmatpush1.xpose.msra.mxu0 0.0
        %443 = vmatprep.subr.mxu0 0.0
        %444 = vmatpush1.xpose.msra.mxu0 0.0
        %445 = vmatprep.subr.mxu0 0.0
        %446 = vmatpush1.xpose.msra.mxu0 0.0
        %447 = vmatprep.subr.mxu0 0.0
        %448 = vmatpush1.xpose.msra.mxu0 0.0
        %449 = vmatprep.subr.mxu0 0.0
        %450 = vmatpush1.xpose.msra.mxu0 0.0
        %451 = vmatprep.subr.mxu0 0.0
        %452 = vmatpush1.xpose.msra.mxu0 0.0
        %453 = vmatprep.subr.mxu0 0.0
        %454 = vmatpush1.xpose.msra.mxu0 0.0
        %455 = vmatprep.subr.mxu0 0.0
        %456 = vmatpush1.xpose.msra.mxu0 0.0
        %457 = vmatprep.subr.mxu0 0.0
        %458 = vmatpush1.xpose.msra.mxu0 0.0
        %459 = vmatprep.subr.mxu0 0.0
        %460 = vmatpush1.xpose.msra.mxu0 %v427
        %461 = vmatprep.subr.mxu0 0.0
        %462 = vmatpush2.xpose.msra.mxu0 0.0
        %463 = vmatprep.subr.mxu0 0.0
        %464 = vmatpush2.xpose.msra.mxu0 0.0
        %465 = vmatprep.subr.mxu0 0.0
        %466 = vmatpush2.xpose.msra.mxu0 0.0
        %467 = vmatprep.subr.mxu0 0.0
        %468 = vmatpush2.xpose.msra.mxu0 0.0
        %469 = vmatprep.subr.mxu0 0.0
        %470 = vmatpush2.xpose.msra.mxu0 0.0
        %471 = vmatprep.subr.mxu0 0.0
        %472 = vmatpush2.xpose.msra.mxu0 0.0
        %473 = vmatprep.subr.mxu0 0.0
        %474 = vmatpush2.xpose.msra.mxu0 0.0
        %475 = vmatprep.subr.mxu0 0.0
        %476 = vmatpush2.xpose.msra.mxu0 0.0
        %477 = vmatprep.subr.mxu0 0.0
        %478 = vmatpush2.xpose.msra.mxu0 0.0
        %479 = vmatprep.subr.mxu0 0.0
        %480 = vmatpush2.xpose.msra.mxu0 0.0
        %481 = vmatprep.subr.mxu0 0.0
        %482 = vmatpush2.xpose.msra.mxu0 0.0
        %483 = vmatprep.subr.mxu0 0.0
        %484 = vmatpush2.xpose.msra.mxu0 0.0
        %485 = vmatprep.subr.mxu0 0.0
        %486 = vmatpush2.xpose.msra.mxu0 0.0
        %487 = vmatprep.subr.mxu0 0.0
        %488 = vmatpush2.xpose.msra.mxu0 0.0
        %489 = vmatprep.subr.mxu0 0.0
        %490 = vmatpush2.xpose.msra.mxu0 0.0
        %491 = vmatprep.subr.mxu0 0.0
        %492 = vmatpush2.xpose.msra.mxu0 0.0
        %493 = vmatprep.mubr.f32.mxu0 0.0
        %494 = vmatmul.mubr.f32.gmra.mxu0 %v391
        %v495 = vpop.f32.mrf.mxu0
        %v496 = vadd.f32 %v333, %v495
        %v497 = vpop.f32.mrf.mxu0
        %498 = vmatprep.mubr.f32.mxu0 0.0
        %499 = vmatmul.mubr.f32.gmra.mxu0 %v394
        %v500 = vpop.f32.mrf.mxu0
        %v501 = vadd.f32 %v338, %v500
        %v502 = vpop.f32.mrf.mxu0
        %503 = vmatprep.mubr.f32.mxu0 0.0
        %504 = vmatmul.mubr.f32.gmra.mxu0 %v397
        %v505 = vpop.f32.mrf.mxu0
        %v506 = vadd.f32 %v343, %v505
        %v507 = vpop.f32.mrf.mxu0
        %508 = vmatprep.mubr.f32.mxu0 0.0
        %509 = vmatmul.mubr.f32.gmra.mxu0 %v400
        %v510 = vpop.f32.mrf.mxu0
        %v511 = vadd.f32 %v348, %v510
        %v512 = vpop.f32.mrf.mxu0
        %513 = vmatprep.mubr.f32.mxu0 0.0
        %514 = vmatmul.mubr.f32.gmra.mxu0 %v403
        %v515 = vpop.f32.mrf.mxu0
        %v516 = vadd.f32 %v353, %v515
        %v517 = vpop.f32.mrf.mxu0
        %518 = vmatprep.mubr.f32.mxu0 0.0
        %519 = vmatmul.mubr.f32.gmra.mxu0 %v406
        %v520 = vpop.f32.mrf.mxu0
        %v521 = vadd.f32 %v358, %v520
        %v522 = vpop.f32.mrf.mxu0
        %523 = vmatprep.mubr.f32.mxu0 0.0
        %524 = vmatmul.mubr.f32.gmra.mxu0 %v409
        %v525 = vpop.f32.mrf.mxu0
        %v526 = vadd.f32 %v363, %v525
        %v527 = vpop.f32.mrf.mxu0
        %528 = vmatprep.mubr.f32.mxu0 0.0
        %529 = vmatmul.mubr.f32.gmra.mxu0 %v412
        %v530 = vpop.f32.mrf.mxu0
        %v531 = vadd.f32 %v368, %v530
        %v532 = vpop.f32.mrf.mxu0
        %533 = vmatprep.mubr.f32.mxu0 0.0
        %534 = vmatmul.mubr.f32.gmra.mxu0 %v415
        %v535 = vpop.f32.mrf.mxu0
        %v536 = vadd.f32 %v373, %v535
        %v537 = vpop.f32.mrf.mxu0
        %538 = vmatprep.mubr.f32.mxu0 0.0
        %539 = vmatmul.mubr.f32.gmra.mxu0 %v418
        %v540 = vpop.f32.mrf.mxu0
        %v541 = vadd.f32 %v378, %v540
        %v542 = vpop.f32.mrf.mxu0
        %543 = vmatprep.mubr.f32.mxu0 0.0
        %544 = vmatmul.mubr.f32.gmra.mxu0 %v421
        %v545 = vpop.f32.mrf.mxu0
        %v546 = vadd.f32 %v383, %v545
        %v547 = vpop.f32.mrf.mxu0
        %548 = vmatprep.mubr.f32.mxu0 0.0
        %549 = vmatmul.mubr.f32.gmra.mxu0 %v424
        %v550 = vpop.f32.mrf.mxu0
        %v551 = vadd.f32 %v388, %v550
        %v552 = vpop.f32.mrf.mxu0
        %553 = vdwg.mxu0
        %v554 = vmul.f32 %v496, 0.35355338
        %v555 = vmul.f32 %v501, 0.35355338
        %v556 = vmul.f32 %v506, 0.35355338
        %v557 = vmul.f32 %v511, 0.35355338
        %558 = vxpose.xlu0.b32.start [1/16] %v554, 128
        %559 = vxpose.xlu0.b32.cont [2/16] 0.0, 128
        %560 = vxpose.xlu0.b32.cont [3/16] 0.0, 128
        %561 = vxpose.xlu0.b32.cont [4/16] 0.0, 128
        %562 = vxpose.xlu0.b32.cont [5/16] 0.0, 128
        %563 = vxpose.xlu0.b32.cont [6/16] 0.0, 128
        %564 = vxpose.xlu0.b32.cont [7/16] 0.0, 128
        %565 = vxpose.xlu0.b32.cont [8/16] 0.0, 128
        %566 = vxpose.xlu0.b32.cont [9/16] 0.0, 128
        %567 = vxpose.xlu0.b32.cont [10/16] 0.0, 128
        %568 = vxpose.xlu0.b32.cont [11/16] 0.0, 128
        %569 = vxpose.xlu0.b32.cont [12/16] 0.0, 128
        %570 = vxpose.xlu0.b32.cont [13/16] 0.0, 128
        %571 = vxpose.xlu0.b32.cont [14/16] 0.0, 128
        %572 = vxpose.xlu0.b32.cont [15/16] 0.0, 128
        %573 = vxpose.xlu0.b32.end [16/16] 0.0, 128
        %v574 = vpop.trf.xlu0
        %v575 = vpop.trf.xlu0
        %v576 = vpop.trf.xlu0
        %v577 = vpop.trf.xlu0
        %v578 = vpop.trf.xlu0
        %v579 = vpop.trf.xlu0
        %v580 = vpop.trf.xlu0
        %v581 = vpop.trf.xlu0
        %v582 = vpop.trf.xlu0
        %v583 = vpop.trf.xlu0
        %v584 = vpop.trf.xlu0
        %v585 = vpop.trf.xlu0
        %v586 = vpop.trf.xlu0
        %v587 = vpop.trf.xlu0
        %v588 = vpop.trf.xlu0
        %v589 = vpop.trf.xlu0
        %vm590 = vcmask 64512
        %v592 = vsel %vm590, %v574, 0
        %594 = vmatprep.subr.mxu0 0.0
        %595 = vmatpush1.msra.mxu0 0.0
        %596 = vmatprep.subr.mxu0 0.0
        %597 = vmatpush1.msra.mxu0 0.0
        %598 = vmatprep.subr.mxu0 0.0
        %599 = vmatpush1.msra.mxu0 0.0
        %600 = vmatprep.subr.mxu0 0.0
        %601 = vmatpush1.msra.mxu0 0.0
        %602 = vmatprep.subr.mxu0 0.0
        %603 = vmatpush1.msra.mxu0 0.0
        %604 = vmatprep.subr.mxu0 0.0
        %605 = vmatpush1.msra.mxu0 0.0
        %606 = vmatprep.subr.mxu0 0.0
        %607 = vmatpush1.msra.mxu0 0.0
        %608 = vmatprep.subr.mxu0 0.0
        %609 = vmatpush1.msra.mxu0 0.0
        %610 = vmatprep.subr.mxu0 0.0
        %611 = vmatpush1.msra.mxu0 0.0
        %612 = vmatprep.subr.mxu0 0.0
        %613 = vmatpush1.msra.mxu0 0.0
        %614 = vmatprep.subr.mxu0 0.0
        %615 = vmatpush1.msra.mxu0 0.0
        %616 = vmatprep.subr.mxu0 0.0
        %617 = vmatpush1.msra.mxu0 0.0
        %618 = vmatprep.subr.mxu0 0.0
        %619 = vmatpush1.msra.mxu0 0.0
        %620 = vmatprep.subr.mxu0 0.0
        %621 = vmatpush1.msra.mxu0 0.0
        %622 = vmatprep.subr.mxu0 0.0
        %623 = vmatpush1.msra.mxu0 0.0
        %624 = vmatprep.subr.mxu0 0.0
        %625 = vmatpush1.msra.mxu0 %v516
        %626 = vmatprep.subr.mxu0 0.0
        %627 = vmatpush2.msra.mxu0 0.0
        %628 = vmatprep.subr.mxu0 0.0
        %629 = vmatpush2.msra.mxu0 0.0
        %630 = vmatprep.subr.mxu0 0.0
        %631 = vmatpush2.msra.mxu0 0.0
        %632 = vmatprep.subr.mxu0 0.0
        %633 = vmatpush2.msra.mxu0 0.0
        %634 = vmatprep.subr.mxu0 0.0
        %635 = vmatpush2.msra.mxu0 0.0
        %636 = vmatprep.subr.mxu0 0.0
        %637 = vmatpush2.msra.mxu0 0.0
        %638 = vmatprep.subr.mxu0 0.0
        %639 = vmatpush2.msra.mxu0 0.0
        %640 = vmatprep.subr.mxu0 0.0
        %641 = vmatpush2.msra.mxu0 0.0
        %642 = vmatprep.subr.mxu0 0.0
        %643 = vmatpush2.msra.mxu0 0.0
        %644 = vmatprep.subr.mxu0 0.0
        %645 = vmatpush2.msra.mxu0 0.0
        %646 = vmatprep.subr.mxu0 0.0
        %647 = vmatpush2.msra.mxu0 0.0
        %648 = vmatprep.subr.mxu0 0.0
        %649 = vmatpush2.msra.mxu0 0.0
        %650 = vmatprep.subr.mxu0 0.0
        %651 = vmatpush2.msra.mxu0 0.0
        %652 = vmatprep.subr.mxu0 0.0
        %653 = vmatpush2.msra.mxu0 0.0
        %654 = vmatprep.subr.mxu0 0.0
        %655 = vmatpush2.msra.mxu0 0.0
        %656 = vmatprep.subr.mxu0 0.0
        %657 = vmatpush2.msra.mxu0 0.0
        %658 = vmatprep.mubr.f32.mxu0 0.0
        %659 = vmatmul.mubr.f32.gmra.mxu0 %v592
        %v660 = vpop.f32.mrf.mxu0
        %v661 = vadd.f32 0.0, %v660
        %v662 = vpop.f32.mrf.mxu0
        %663 = vdwg.mxu0
        %664 = vxpose.xlu0.b32.start [1/16] %v555, 128
        %665 = vxpose.xlu0.b32.cont [2/16] 0.0, 128
        %666 = vxpose.xlu0.b32.cont [3/16] 0.0, 128
        %667 = vxpose.xlu0.b32.cont [4/16] 0.0, 128
        %668 = vxpose.xlu0.b32.cont [5/16] 0.0, 128
        %669 = vxpose.xlu0.b32.cont [6/16] 0.0, 128
        %670 = vxpose.xlu0.b32.cont [7/16] 0.0, 128
        %671 = vxpose.xlu0.b32.cont [8/16] 0.0, 128
        %672 = vxpose.xlu0.b32.cont [9/16] 0.0, 128
        %673 = vxpose.xlu0.b32.cont [10/16] 0.0, 128
        %674 = vxpose.xlu0.b32.cont [11/16] 0.0, 128
        %675 = vxpose.xlu0.b32.cont [12/16] 0.0, 128
        %676 = vxpose.xlu0.b32.cont [13/16] 0.0, 128
        %677 = vxpose.xlu0.b32.cont [14/16] 0.0, 128
        %678 = vxpose.xlu0.b32.cont [15/16] 0.0, 128
        %679 = vxpose.xlu0.b32.end [16/16] 0.0, 128
        %v680 = vpop.trf.xlu0
        %v681 = vpop.trf.xlu0
        %v682 = vpop.trf.xlu0
        %v683 = vpop.trf.xlu0
        %v684 = vpop.trf.xlu0
        %v685 = vpop.trf.xlu0
        %v686 = vpop.trf.xlu0
        %v687 = vpop.trf.xlu0
        %v688 = vpop.trf.xlu0
        %v689 = vpop.trf.xlu0
        %v690 = vpop.trf.xlu0
        %v691 = vpop.trf.xlu0
        %v692 = vpop.trf.xlu0
        %v693 = vpop.trf.xlu0
        %v694 = vpop.trf.xlu0
        %v695 = vpop.trf.xlu0
        %v697 = vsel %vm590, %v680, 0
        %699 = vmatprep.subr.mxu0 0.0
        %700 = vmatpush1.msra.mxu0 0.0
        %701 = vmatprep.subr.mxu0 0.0
        %702 = vmatpush1.msra.mxu0 0.0
        %703 = vmatprep.subr.mxu0 0.0
        %704 = vmatpush1.msra.mxu0 0.0
        %705 = vmatprep.subr.mxu0 0.0
        %706 = vmatpush1.msra.mxu0 0.0
        %707 = vmatprep.subr.mxu0 0.0
        %708 = vmatpush1.msra.mxu0 0.0
        %709 = vmatprep.subr.mxu0 0.0
        %710 = vmatpush1.msra.mxu0 0.0
        %711 = vmatprep.subr.mxu0 0.0
        %712 = vmatpush1.msra.mxu0 0.0
        %713 = vmatprep.subr.mxu0 0.0
        %714 = vmatpush1.msra.mxu0 0.0
        %715 = vmatprep.subr.mxu0 0.0
        %716 = vmatpush1.msra.mxu0 0.0
        %717 = vmatprep.subr.mxu0 0.0
        %718 = vmatpush1.msra.mxu0 0.0
        %719 = vmatprep.subr.mxu0 0.0
        %720 = vmatpush1.msra.mxu0 0.0
        %721 = vmatprep.subr.mxu0 0.0
        %722 = vmatpush1.msra.mxu0 0.0
        %723 = vmatprep.subr.mxu0 0.0
        %724 = vmatpush1.msra.mxu0 0.0
        %725 = vmatprep.subr.mxu0 0.0
        %726 = vmatpush1.msra.mxu0 0.0
        %727 = vmatprep.subr.mxu0 0.0
        %728 = vmatpush1.msra.mxu0 0.0
        %729 = vmatprep.subr.mxu0 0.0
        %730 = vmatpush1.msra.mxu0 %v521
        %731 = vmatprep.subr.mxu0 0.0
        %732 = vmatpush2.msra.mxu0 0.0
        %733 = vmatprep.subr.mxu0 0.0
        %734 = vmatpush2.msra.mxu0 0.0
        %735 = vmatprep.subr.mxu0 0.0
        %736 = vmatpush2.msra.mxu0 0.0
        %737 = vmatprep.subr.mxu0 0.0
        %738 = vmatpush2.msra.mxu0 0.0
        %739 = vmatprep.subr.mxu0 0.0
        %740 = vmatpush2.msra.mxu0 0.0
        %741 = vmatprep.subr.mxu0 0.0
        %742 = vmatpush2.msra.mxu0 0.0
        %743 = vmatprep.subr.mxu0 0.0
        %744 = vmatpush2.msra.mxu0 0.0
        %745 = vmatprep.subr.mxu0 0.0
        %746 = vmatpush2.msra.mxu0 0.0
        %747 = vmatprep.subr.mxu0 0.0
        %748 = vmatpush2.msra.mxu0 0.0
        %749 = vmatprep.subr.mxu0 0.0
        %750 = vmatpush2.msra.mxu0 0.0
        %751 = vmatprep.subr.mxu0 0.0
        %752 = vmatpush2.msra.mxu0 0.0
        %753 = vmatprep.subr.mxu0 0.0
        %754 = vmatpush2.msra.mxu0 0.0
        %755 = vmatprep.subr.mxu0 0.0
        %756 = vmatpush2.msra.mxu0 0.0
        %757 = vmatprep.subr.mxu0 0.0
        %758 = vmatpush2.msra.mxu0 0.0
        %759 = vmatprep.subr.mxu0 0.0
        %760 = vmatpush2.msra.mxu0 0.0
        %761 = vmatprep.subr.mxu0 0.0
        %762 = vmatpush2.msra.mxu0 0.0
        %763 = vmatprep.mubr.f32.mxu0 0.0
        %764 = vmatmul.mubr.f32.gmra.mxu0 %v697
        %v765 = vpop.f32.mrf.mxu0
        %v766 = vadd.f32 0.0, %v765
        %v767 = vpop.f32.mrf.mxu0
        %768 = vdwg.mxu0
        %769 = vxpose.xlu0.b32.start [1/16] %v556, 128
        %770 = vxpose.xlu0.b32.cont [2/16] 0.0, 128
        %771 = vxpose.xlu0.b32.cont [3/16] 0.0, 128
        %772 = vxpose.xlu0.b32.cont [4/16] 0.0, 128
        %773 = vxpose.xlu0.b32.cont [5/16] 0.0, 128
        %774 = vxpose.xlu0.b32.cont [6/16] 0.0, 128
        %775 = vxpose.xlu0.b32.cont [7/16] 0.0, 128
        %776 = vxpose.xlu0.b32.cont [8/16] 0.0, 128
        %777 = vxpose.xlu0.b32.cont [9/16] 0.0, 128
        %778 = vxpose.xlu0.b32.cont [10/16] 0.0, 128
        %779 = vxpose.xlu0.b32.cont [11/16] 0.0, 128
        %780 = vxpose.xlu0.b32.cont [12/16] 0.0, 128
        %781 = vxpose.xlu0.b32.cont [13/16] 0.0, 128
        %782 = vxpose.xlu0.b32.cont [14/16] 0.0, 128
        %783 = vxpose.xlu0.b32.cont [15/16] 0.0, 128
        %784 = vxpose.xlu0.b32.end [16/16] 0.0, 128
        %v785 = vpop.trf.xlu0
        %v786 = vpop.trf.xlu0
        %v787 = vpop.trf.xlu0
        %v788 = vpop.trf.xlu0
        %v789 = vpop.trf.xlu0
        %v790 = vpop.trf.xlu0
        %v791 = vpop.trf.xlu0
        %v792 = vpop.trf.xlu0
        %v793 = vpop.trf.xlu0
        %v794 = vpop.trf.xlu0
        %v795 = vpop.trf.xlu0
        %v796 = vpop.trf.xlu0
        %v797 = vpop.trf.xlu0
        %v798 = vpop.trf.xlu0
        %v799 = vpop.trf.xlu0
        %v800 = vpop.trf.xlu0
        %v802 = vsel %vm590, %v785, 0
        %804 = vmatprep.subr.mxu0 0.0
        %805 = vmatpush1.msra.mxu0 0.0
        %806 = vmatprep.subr.mxu0 0.0
        %807 = vmatpush1.msra.mxu0 0.0
        %808 = vmatprep.subr.mxu0 0.0
        %809 = vmatpush1.msra.mxu0 0.0
        %810 = vmatprep.subr.mxu0 0.0
        %811 = vmatpush1.msra.mxu0 0.0
        %812 = vmatprep.subr.mxu0 0.0
        %813 = vmatpush1.msra.mxu0 0.0
        %814 = vmatprep.subr.mxu0 0.0
        %815 = vmatpush1.msra.mxu0 0.0
        %816 = vmatprep.subr.mxu0 0.0
        %817 = vmatpush1.msra.mxu0 0.0
        %818 = vmatprep.subr.mxu0 0.0
        %819 = vmatpush1.msra.mxu0 0.0
        %820 = vmatprep.subr.mxu0 0.0
        %821 = vmatpush1.msra.mxu0 0.0
        %822 = vmatprep.subr.mxu0 0.0
        %823 = vmatpush1.msra.mxu0 0.0
        %824 = vmatprep.subr.mxu0 0.0
        %825 = vmatpush1.msra.mxu0 0.0
        %826 = vmatprep.subr.mxu0 0.0
        %827 = vmatpush1.msra.mxu0 0.0
        %828 = vmatprep.subr.mxu0 0.0
        %829 = vmatpush1.msra.mxu0 0.0
        %830 = vmatprep.subr.mxu0 0.0
        %831 = vmatpush1.msra.mxu0 0.0
        %832 = vmatprep.subr.mxu0 0.0
        %833 = vmatpush1.msra.mxu0 0.0
        %834 = vmatprep.subr.mxu0 0.0
        %835 = vmatpush1.msra.mxu0 %v526
        %836 = vmatprep.subr.mxu0 0.0
        %837 = vmatpush2.msra.mxu0 0.0
        %838 = vmatprep.subr.mxu0 0.0
        %839 = vmatpush2.msra.mxu0 0.0
        %840 = vmatprep.subr.mxu0 0.0
        %841 = vmatpush2.msra.mxu0 0.0
        %842 = vmatprep.subr.mxu0 0.0
        %843 = vmatpush2.msra.mxu0 0.0
        %844 = vmatprep.subr.mxu0 0.0
        %845 = vmatpush2.msra.mxu0 0.0
        %846 = vmatprep.subr.mxu0 0.0
        %847 = vmatpush2.msra.mxu0 0.0
        %848 = vmatprep.subr.mxu0 0.0
        %849 = vmatpush2.msra.mxu0 0.0
        %850 = vmatprep.subr.mxu0 0.0
        %851 = vmatpush2.msra.mxu0 0.0
        %852 = vmatprep.subr.mxu0 0.0
        %853 = vmatpush2.msra.mxu0 0.0
        %854 = vmatprep.subr.mxu0 0.0
        %855 = vmatpush2.msra.mxu0 0.0
        %856 = vmatprep.subr.mxu0 0.0
        %857 = vmatpush2.msra.mxu0 0.0
        %858 = vmatprep.subr.mxu0 0.0
        %859 = vmatpush2.msra.mxu0 0.0
        %860 = vmatprep.subr.mxu0 0.0
        %861 = vmatpush2.msra.mxu0 0.0
        %862 = vmatprep.subr.mxu0 0.0
        %863 = vmatpush2.msra.mxu0 0.0
        %864 = vmatprep.subr.mxu0 0.0
        %865 = vmatpush2.msra.mxu0 0.0
        %866 = vmatprep.subr.mxu0 0.0
        %867 = vmatpush2.msra.mxu0 0.0
        %868 = vmatprep.mubr.f32.mxu0 0.0
        %869 = vmatmul.mubr.f32.gmra.mxu0 %v802
        %v870 = vpop.f32.mrf.mxu0
        %v871 = vadd.f32 0.0, %v870
        %v872 = vpop.f32.mrf.mxu0
        %873 = vdwg.mxu0
        %874 = vxpose.xlu0.b32.start [1/16] %v557, 128
        %875 = vxpose.xlu0.b32.cont [2/16] 0.0, 128
        %876 = vxpose.xlu0.b32.cont [3/16] 0.0, 128
        %877 = vxpose.xlu0.b32.cont [4/16] 0.0, 128
        %878 = vxpose.xlu0.b32.cont [5/16] 0.0, 128
        %879 = vxpose.xlu0.b32.cont [6/16] 0.0, 128
        %880 = vxpose.xlu0.b32.cont [7/16] 0.0, 128
        %881 = vxpose.xlu0.b32.cont [8/16] 0.0, 128
        %882 = vxpose.xlu0.b32.cont [9/16] 0.0, 128
        %883 = vxpose.xlu0.b32.cont [10/16] 0.0, 128
        %884 = vxpose.xlu0.b32.cont [11/16] 0.0, 128
        %885 = vxpose.xlu0.b32.cont [12/16] 0.0, 128
        %886 = vxpose.xlu0.b32.cont [13/16] 0.0, 128
        %887 = vxpose.xlu0.b32.cont [14/16] 0.0, 128
        %888 = vxpose.xlu0.b32.cont [15/16] 0.0, 128
        %889 = vxpose.xlu0.b32.end [16/16] 0.0, 128
        %v890 = vpop.trf.xlu0
        %v891 = vpop.trf.xlu0
        %v892 = vpop.trf.xlu0
        %v893 = vpop.trf.xlu0
        %v894 = vpop.trf.xlu0
        %v895 = vpop.trf.xlu0
        %v896 = vpop.trf.xlu0
        %v897 = vpop.trf.xlu0
        %v898 = vpop.trf.xlu0
        %v899 = vpop.trf.xlu0
        %v900 = vpop.trf.xlu0
        %v901 = vpop.trf.xlu0
        %v902 = vpop.trf.xlu0
        %v903 = vpop.trf.xlu0
        %v904 = vpop.trf.xlu0
        %v905 = vpop.trf.xlu0
        %v907 = vsel %vm590, %v890, 0
        %909 = vmatprep.subr.mxu0 0.0
        %910 = vmatpush1.msra.mxu0 0.0
        %911 = vmatprep.subr.mxu0 0.0
        %912 = vmatpush1.msra.mxu0 0.0
        %913 = vmatprep.subr.mxu0 0.0
        %914 = vmatpush1.msra.mxu0 0.0
        %915 = vmatprep.subr.mxu0 0.0
        %916 = vmatpush1.msra.mxu0 0.0
        %917 = vmatprep.subr.mxu0 0.0
        %918 = vmatpush1.msra.mxu0 0.0
        %919 = vmatprep.subr.mxu0 0.0
        %920 = vmatpush1.msra.mxu0 0.0
        %921 = vmatprep.subr.mxu0 0.0
        %922 = vmatpush1.msra.mxu0 0.0
        %923 = vmatprep.subr.mxu0 0.0
        %924 = vmatpush1.msra.mxu0 0.0
        %925 = vmatprep.subr.mxu0 0.0
        %926 = vmatpush1.msra.mxu0 0.0
        %927 = vmatprep.subr.mxu0 0.0
        %928 = vmatpush1.msra.mxu0 0.0
        %929 = vmatprep.subr.mxu0 0.0
        %930 = vmatpush1.msra.mxu0 0.0
        %931 = vmatprep.subr.mxu0 0.0
        %932 = vmatpush1.msra.mxu0 0.0
        %933 = vmatprep.subr.mxu0 0.0
        %934 = vmatpush1.msra.mxu0 0.0
        %935 = vmatprep.subr.mxu0 0.0
        %936 = vmatpush1.msra.mxu0 0.0
        %937 = vmatprep.subr.mxu0 0.0
        %938 = vmatpush1.msra.mxu0 0.0
        %939 = vmatprep.subr.mxu0 0.0
        %940 = vmatpush1.msra.mxu0 %v531
        %941 = vmatprep.subr.mxu0 0.0
        %942 = vmatpush2.msra.mxu0 0.0
        %943 = vmatprep.subr.mxu0 0.0
        %944 = vmatpush2.msra.mxu0 0.0
        %945 = vmatprep.subr.mxu0 0.0
        %946 = vmatpush2.msra.mxu0 0.0
        %947 = vmatprep.subr.mxu0 0.0
        %948 = vmatpush2.msra.mxu0 0.0
        %949 = vmatprep.subr.mxu0 0.0
        %950 = vmatpush2.msra.mxu0 0.0
        %951 = vmatprep.subr.mxu0 0.0
        %952 = vmatpush2.msra.mxu0 0.0
        %953 = vmatprep.subr.mxu0 0.0
        %954 = vmatpush2.msra.mxu0 0.0
        %955 = vmatprep.subr.mxu0 0.0
        %956 = vmatpush2.msra.mxu0 0.0
        %957 = vmatprep.subr.mxu0 0.0
        %958 = vmatpush2.msra.mxu0 0.0
        %959 = vmatprep.subr.mxu0 0.0
        %960 = vmatpush2.msra.mxu0 0.0
        %961 = vmatprep.subr.mxu0 0.0
        %962 = vmatpush2.msra.mxu0 0.0
        %963 = vmatprep.subr.mxu0 0.0
        %964 = vmatpush2.msra.mxu0 0.0
        %965 = vmatprep.subr.mxu0 0.0
        %966 = vmatpush2.msra.mxu0 0.0
        %967 = vmatprep.subr.mxu0 0.0
        %968 = vmatpush2.msra.mxu0 0.0
        %969 = vmatprep.subr.mxu0 0.0
        %970 = vmatpush2.msra.mxu0 0.0
        %971 = vmatprep.subr.mxu0 0.0
        %972 = vmatpush2.msra.mxu0 0.0
        %973 = vmatprep.mubr.f32.mxu0 0.0
        %974 = vmatmul.mubr.f32.gmra.mxu0 %v907
        %v975 = vpop.f32.mrf.mxu0
        %v976 = vadd.f32 0.0, %v975
        %v977 = vpop.f32.mrf.mxu0
        %978 = vdwg.mxu0
        %v979 = vsel %vm590, %v661, -inf
        %980 = vmax.xlane.f32.xlu0 %v979
        %v981 = vpop.xlane.xlu0 %980
        %v982 = vsel %vm590, %v766, -inf
        %983 = vmax.xlane.f32.xlu0 %v982
        %v984 = vpop.xlane.xlu0 %983
        %v985 = vsel %vm590, %v871, -inf
        %986 = vmax.xlane.f32.xlu0 %v985
        %v987 = vpop.xlane.xlu0 %986
        %v988 = vsel %vm590, %v976, -inf
        %989 = vmax.xlane.f32.xlu0 %v988
        %v990 = vpop.xlane.xlu0 %989
        %v991 = vsub.f32 %v661, %v981
        %v992 = vsub.f32 %v766, %v984
        %v993 = vsub.f32 %v871, %v987
        %v994 = vsub.f32 %v976, %v990
        %v995 = vmul.f32 %v991, 1.442695
        %v996 = vpow.pop %v995
        %v997 = vmul.f32 %v992, 1.442695
        %v998 = vpow.pop %v997
        %v999 = vmul.f32 %v993, 1.442695
        %v1000 = vpow.pop %v999
        %v1001 = vmul.f32 %v994, 1.442695
        %v1002 = vpow.pop %v1001
        %v1003 = vsel %vm590, %v996, 0.0
        %1004 = vadd.xlane.f32.xlu0 %v1003
        %v1005 = vpop.xlane.xlu0 %1004
        %v1006 = vsel %vm590, %v998, 0.0
        %1007 = vadd.xlane.f32.xlu0 %v1006
        %v1008 = vpop.xlane.xlu0 %1007
        %v1009 = vsel %vm590, %v1000, 0.0
        %1010 = vadd.xlane.f32.xlu0 %v1009
        %v1011 = vpop.xlane.xlu0 %1010
        %v1012 = vsel %vm590, %v1002, 0.0
        %1013 = vadd.xlane.f32.xlu0 %v1012
        %v1014 = vpop.xlane.xlu0 %1013
        %v1015 = vrcp.pop %v1005
        %v1016 = vrcp.pop %v1008
        %v1017 = vrcp.pop %v1011
        %v1018 = vrcp.pop %v1014
        %v1019 = vmul.f32 %v996, %v1015
        %v1020 = vmul.f32 %v998, %v1016
        %v1021 = vmul.f32 %v1000, %v1017
        %v1022 = vmul.f32 %v1002, %v1018
        %v1024 = vsel %vm590, %v536, 0
        %v1027 = vsel %vm590, %v1019, 0
        %1029 = vmatprep.subr.mxu0 0.0
        %1030 = vmatpush1.xpose.msra.mxu0 0.0
        %1031 = vmatprep.subr.mxu0 0.0
        %1032 = vmatpush1.xpose.msra.mxu0 0.0
        %1033 = vmatprep.subr.mxu0 0.0
        %1034 = vmatpush1.xpose.msra.mxu0 0.0
        %1035 = vmatprep.subr.mxu0 0.0
        %1036 = vmatpush1.xpose.msra.mxu0 0.0
        %1037 = vmatprep.subr.mxu0 0.0
        %1038 = vmatpush1.xpose.msra.mxu0 0.0
        %1039 = vmatprep.subr.mxu0 0.0
        %1040 = vmatpush1.xpose.msra.mxu0 0.0
        %1041 = vmatprep.subr.mxu0 0.0
        %1042 = vmatpush1.xpose.msra.mxu0 0.0
        %1043 = vmatprep.subr.mxu0 0.0
        %1044 = vmatpush1.xpose.msra.mxu0 0.0
        %1045 = vmatprep.subr.mxu0 0.0
        %1046 = vmatpush1.xpose.msra.mxu0 0.0
        %1047 = vmatprep.subr.mxu0 0.0
        %1048 = vmatpush1.xpose.msra.mxu0 0.0
        %1049 = vmatprep.subr.mxu0 0.0
        %1050 = vmatpush1.xpose.msra.mxu0 0.0
        %1051 = vmatprep.subr.mxu0 0.0
        %1052 = vmatpush1.xpose.msra.mxu0 0.0
        %1053 = vmatprep.subr.mxu0 0.0
        %1054 = vmatpush1.xpose.msra.mxu0 0.0
        %1055 = vmatprep.subr.mxu0 0.0
        %1056 = vmatpush1.xpose.msra.mxu0 0.0
        %1057 = vmatprep.subr.mxu0 0.0
        %1058 = vmatpush1.xpose.msra.mxu0 0.0
        %1059 = vmatprep.subr.mxu0 0.0
        %1060 = vmatpush1.xpose.msra.mxu0 %v1027
        %1061 = vmatprep.subr.mxu0 0.0
        %1062 = vmatpush2.xpose.msra.mxu0 0.0
        %1063 = vmatprep.subr.mxu0 0.0
        %1064 = vmatpush2.xpose.msra.mxu0 0.0
        %1065 = vmatprep.subr.mxu0 0.0
        %1066 = vmatpush2.xpose.msra.mxu0 0.0
        %1067 = vmatprep.subr.mxu0 0.0
        %1068 = vmatpush2.xpose.msra.mxu0 0.0
        %1069 = vmatprep.subr.mxu0 0.0
        %1070 = vmatpush2.xpose.msra.mxu0 0.0
        %1071 = vmatprep.subr.mxu0 0.0
        %1072 = vmatpush2.xpose.msra.mxu0 0.0
        %1073 = vmatprep.subr.mxu0 0.0
        %1074 = vmatpush2.xpose.msra.mxu0 0.0
        %1075 = vmatprep.subr.mxu0 0.0
        %1076 = vmatpush2.xpose.msra.mxu0 0.0
        %1077 = vmatprep.subr.mxu0 0.0
        %1078 = vmatpush2.xpose.msra.mxu0 0.0
        %1079 = vmatprep.subr.mxu0 0.0
        %1080 = vmatpush2.xpose.msra.mxu0 0.0
        %1081 = vmatprep.subr.mxu0 0.0
        %1082 = vmatpush2.xpose.msra.mxu0 0.0
        %1083 = vmatprep.subr.mxu0 0.0
        %1084 = vmatpush2.xpose.msra.mxu0 0.0
        %1085 = vmatprep.subr.mxu0 0.0
        %1086 = vmatpush2.xpose.msra.mxu0 0.0
        %1087 = vmatprep.subr.mxu0 0.0
        %1088 = vmatpush2.xpose.msra.mxu0 0.0
        %1089 = vmatprep.subr.mxu0 0.0
        %1090 = vmatpush2.xpose.msra.mxu0 0.0
        %1091 = vmatprep.subr.mxu0 0.0
        %1092 = vmatpush2.xpose.msra.mxu0 0.0
        %1093 = vmatprep.mubr.f32.mxu0 0.0
        %1094 = vmatmul.mubr.f32.gmra.mxu0 %v1024
        %v1095 = vpop.f32.mrf.mxu0
        %v1096 = vadd.f32 0.0, %v1095
        %v1097 = vpop.f32.mrf.mxu0
        %1098 = vdwg.mxu0
        %v1100 = vsel %vm590, %v541, 0
        %v1103 = vsel %vm590, %v1020, 0
        %1105 = vmatprep.subr.mxu0 0.0
        %1106 = vmatpush1.xpose.msra.mxu0 0.0
        %1107 = vmatprep.subr.mxu0 0.0
        %1108 = vmatpush1.xpose.msra.mxu0 0.0
        %1109 = vmatprep.subr.mxu0 0.0
        %1110 = vmatpush1.xpose.msra.mxu0 0.0
        %1111 = vmatprep.subr.mxu0 0.0
        %1112 = vmatpush1.xpose.msra.mxu0 0.0
        %1113 = vmatprep.subr.mxu0 0.0
        %1114 = vmatpush1.xpose.msra.mxu0 0.0
        %1115 = vmatprep.subr.mxu0 0.0
        %1116 = vmatpush1.xpose.msra.mxu0 0.0
        %1117 = vmatprep.subr.mxu0 0.0
        %1118 = vmatpush1.xpose.msra.mxu0 0.0
        %1119 = vmatprep.subr.mxu0 0.0
        %1120 = vmatpush1.xpose.msra.mxu0 0.0
        %1121 = vmatprep.subr.mxu0 0.0
        %1122 = vmatpush1.xpose.msra.mxu0 0.0
        %1123 = vmatprep.subr.mxu0 0.0
        %1124 = vmatpush1.xpose.msra.mxu0 0.0
        %1125 = vmatprep.subr.mxu0 0.0
        %1126 = vmatpush1.xpose.msra.mxu0 0.0
        %1127 = vmatprep.subr.mxu0 0.0
        %1128 = vmatpush1.xpose.msra.mxu0 0.0
        %1129 = vmatprep.subr.mxu0 0.0
        %1130 = vmatpush1.xpose.msra.mxu0 0.0
        %1131 = vmatprep.subr.mxu0 0.0
        %1132 = vmatpush1.xpose.msra.mxu0 0.0
        %1133 = vmatprep.subr.mxu0 0.0
        %1134 = vmatpush1.xpose.msra.mxu0 0.0
        %1135 = vmatprep.subr.mxu0 0.0
        %1136 = vmatpush1.xpose.msra.mxu0 %v1103
        %1137 = vmatprep.subr.mxu0 0.0
        %1138 = vmatpush2.xpose.msra.mxu0 0.0
        %1139 = vmatprep.subr.mxu0 0.0
        %1140 = vmatpush2.xpose.msra.mxu0 0.0
        %1141 = vmatprep.subr.mxu0 0.0
        %1142 = vmatpush2.xpose.msra.mxu0 0.0
        %1143 = vmatprep.subr.mxu0 0.0
        %1144 = vmatpush2.xpose.msra.mxu0 0.0
        %1145 = vmatprep.subr.mxu0 0.0
        %1146 = vmatpush2.xpose.msra.mxu0 0.0
        %1147 = vmatprep.subr.mxu0 0.0
        %1148 = vmatpush2.xpose.msra.mxu0 0.0
        %1149 = vmatprep.subr.mxu0 0.0
        %1150 = vmatpush2.xpose.msra.mxu0 0.0
        %1151 = vmatprep.subr.mxu0 0.0
        %1152 = vmatpush2.xpose.msra.mxu0 0.0
        %1153 = vmatprep.subr.mxu0 0.0
        %1154 = vmatpush2.xpose.msra.mxu0 0.0
        %1155 = vmatprep.subr.mxu0 0.0
        %1156 = vmatpush2.xpose.msra.mxu0 0.0
        %1157 = vmatprep.subr.mxu0 0.0
        %1158 = vmatpush2.xpose.msra.mxu0 0.0
        %1159 = vmatprep.subr.mxu0 0.0
        %1160 = vmatpush2.xpose.msra.mxu0 0.0
        %1161 = vmatprep.subr.mxu0 0.0
        %1162 = vmatpush2.xpose.msra.mxu0 0.0
        %1163 = vmatprep.subr.mxu0 0.0
        %1164 = vmatpush2.xpose.msra.mxu0 0.0
        %1165 = vmatprep.subr.mxu0 0.0
        %1166 = vmatpush2.xpose.msra.mxu0 0.0
        %1167 = vmatprep.subr.mxu0 0.0
        %1168 = vmatpush2.xpose.msra.mxu0 0.0
        %1169 = vmatprep.mubr.f32.mxu0 0.0
        %1170 = vmatmul.mubr.f32.gmra.mxu0 %v1100
        %v1171 = vpop.f32.mrf.mxu0
        %v1172 = vadd.f32 0.0, %v1171
        %v1173 = vpop.f32.mrf.mxu0
        %1174 = vdwg.mxu0
        %v1176 = vsel %vm590, %v546, 0
        %v1179 = vsel %vm590, %v1021, 0
        %1181 = vmatprep.subr.mxu0 0.0
        %1182 = vmatpush1.xpose.msra.mxu0 0.0
        %1183 = vmatprep.subr.mxu0 0.0
        %1184 = vmatpush1.xpose.msra.mxu0 0.0
        %1185 = vmatprep.subr.mxu0 0.0
        %1186 = vmatpush1.xpose.msra.mxu0 0.0
        %1187 = vmatprep.subr.mxu0 0.0
        %1188 = vmatpush1.xpose.msra.mxu0 0.0
        %1189 = vmatprep.subr.mxu0 0.0
        %1190 = vmatpush1.xpose.msra.mxu0 0.0
        %1191 = vmatprep.subr.mxu0 0.0
        %1192 = vmatpush1.xpose.msra.mxu0 0.0
        %1193 = vmatprep.subr.mxu0 0.0
        %1194 = vmatpush1.xpose.msra.mxu0 0.0
        %1195 = vmatprep.subr.mxu0 0.0
        %1196 = vmatpush1.xpose.msra.mxu0 0.0
        %1197 = vmatprep.subr.mxu0 0.0
        %1198 = vmatpush1.xpose.msra.mxu0 0.0
        %1199 = vmatprep.subr.mxu0 0.0
        %1200 = vmatpush1.xpose.msra.mxu0 0.0
        %1201 = vmatprep.subr.mxu0 0.0
        %1202 = vmatpush1.xpose.msra.mxu0 0.0
        %1203 = vmatprep.subr.mxu0 0.0
        %1204 = vmatpush1.xpose.msra.mxu0 0.0
        %1205 = vmatprep.subr.mxu0 0.0
        %1206 = vmatpush1.xpose.msra.mxu0 0.0
        %1207 = vmatprep.subr.mxu0 0.0
        %1208 = vmatpush1.xpose.msra.mxu0 0.0
        %1209 = vmatprep.subr.mxu0 0.0
        %1210 = vmatpush1.xpose.msra.mxu0 0.0
        %1211 = vmatprep.subr.mxu0 0.0
        %1212 = vmatpush1.xpose.msra.mxu0 %v1179
        %1213 = vmatprep.subr.mxu0 0.0
        %1214 = vmatpush2.xpose.msra.mxu0 0.0
        %1215 = vmatprep.subr.mxu0 0.0
        %1216 = vmatpush2.xpose.msra.mxu0 0.0
        %1217 = vmatprep.subr.mxu0 0.0
        %1218 = vmatpush2.xpose.msra.mxu0 0.0
        %1219 = vmatprep.subr.mxu0 0.0
        %1220 = vmatpush2.xpose.msra.mxu0 0.0
        %1221 = vmatprep.subr.mxu0 0.0
        %1222 = vmatpush2.xpose.msra.mxu0 0.0
        %1223 = vmatprep.subr.mxu0 0.0
        %1224 = vmatpush2.xpose.msra.mxu0 0.0
        %1225 = vmatprep.subr.mxu0 0.0
        %1226 = vmatpush2.xpose.msra.mxu0 0.0
        %1227 = vmatprep.subr.mxu0 0.0
        %1228 = vmatpush2.xpose.msra.mxu0 0.0
        %1229 = vmatprep.subr.mxu0 0.0
        %1230 = vmatpush2.xpose.msra.mxu0 0.0
        %1231 = vmatprep.subr.mxu0 0.0
        %1232 = vmatpush2.xpose.msra.mxu0 0.0
        %1233 = vmatprep.subr.mxu0 0.0
        %1234 = vmatpush2.xpose.msra.mxu0 0.0
        %1235 = vmatprep.subr.mxu0 0.0
        %1236 = vmatpush2.xpose.msra.mxu0 0.0
        %1237 = vmatprep.subr.mxu0 0.0
        %1238 = vmatpush2.xpose.msra.mxu0 0.0
        %1239 = vmatprep.subr.mxu0 0.0
        %1240 = vmatpush2.xpose.msra.mxu0 0.0
        %1241 = vmatprep.subr.mxu0 0.0
        %1242 = vmatpush2.xpose.msra.mxu0 0.0
        %1243 = vmatprep.subr.mxu0 0.0
        %1244 = vmatpush2.xpose.msra.mxu0 0.0
        %1245 = vmatprep.mubr.f32.mxu0 0.0
        %1246 = vmatmul.mubr.f32.gmra.mxu0 %v1176
        %v1247 = vpop.f32.mrf.mxu0
        %v1248 = vadd.f32 0.0, %v1247
        %v1249 = vpop.f32.mrf.mxu0
        %1250 = vdwg.mxu0
        %v1252 = vsel %vm590, %v551, 0
        %v1255 = vsel %vm590, %v1022, 0
        %1257 = vmatprep.subr.mxu0 0.0
        %1258 = vmatpush1.xpose.msra.mxu0 0.0
        %1259 = vmatprep.subr.mxu0 0.0
        %1260 = vmatpush1.xpose.msra.mxu0 0.0
        %1261 = vmatprep.subr.mxu0 0.0
        %1262 = vmatpush1.xpose.msra.mxu0 0.0
        %1263 = vmatprep.subr.mxu0 0.0
        %1264 = vmatpush1.xpose.msra.mxu0 0.0
        %1265 = vmatprep.subr.mxu0 0.0
        %1266 = vmatpush1.xpose.msra.mxu0 0.0
        %1267 = vmatprep.subr.mxu0 0.0
        %1268 = vmatpush1.xpose.msra.mxu0 0.0
        %1269 = vmatprep.subr.mxu0 0.0
        %1270 = vmatpush1.xpose.msra.mxu0 0.0
        %1271 = vmatprep.subr.mxu0 0.0
        %1272 = vmatpush1.xpose.msra.mxu0 0.0
        %1273 = vmatprep.subr.mxu0 0.0
        %1274 = vmatpush1.xpose.msra.mxu0 0.0
        %1275 = vmatprep.subr.mxu0 0.0
        %1276 = vmatpush1.xpose.msra.mxu0 0.0
        %1277 = vmatprep.subr.mxu0 0.0
        %1278 = vmatpush1.xpose.msra.mxu0 0.0
        %1279 = vmatprep.subr.mxu0 0.0
        %1280 = vmatpush1.xpose.msra.mxu0 0.0
        %1281 = vmatprep.subr.mxu0 0.0
        %1282 = vmatpush1.xpose.msra.mxu0 0.0
        %1283 = vmatprep.subr.mxu0 0.0
        %1284 = vmatpush1.xpose.msra.mxu0 0.0
        %1285 = vmatprep.subr.mxu0 0.0
        %1286 = vmatpush1.xpose.msra.mxu0 0.0
        %1287 = vmatprep.subr.mxu0 0.0
        %1288 = vmatpush1.xpose.msra.mxu0 %v1255
        %1289 = vmatprep.subr.mxu0 0.0
        %1290 = vmatpush2.xpose.msra.mxu0 0.0
        %1291 = vmatprep.subr.mxu0 0.0
        %1292 = vmatpush2.xpose.msra.mxu0 0.0
        %1293 = vmatprep.subr.mxu0 0.0
        %1294 = vmatpush2.xpose.msra.mxu0 0.0
        %1295 = vmatprep.subr.mxu0 0.0
        %1296 = vmatpush2.xpose.msra.mxu0 0.0
        %1297 = vmatprep.subr.mxu0 0.0
        %1298 = vmatpush2.xpose.msra.mxu0 0.0
        %1299 = vmatprep.subr.mxu0 0.0
        %1300 = vmatpush2.xpose.msra.mxu0 0.0
        %1301 = vmatprep.subr.mxu0 0.0
        %1302 = vmatpush2.xpose.msra.mxu0 0.0
        %1303 = vmatprep.subr.mxu0 0.0
        %1304 = vmatpush2.xpose.msra.mxu0 0.0
        %1305 = vmatprep.subr.mxu0 0.0
        %1306 = vmatpush2.xpose.msra.mxu0 0.0
        %1307 = vmatprep.subr.mxu0 0.0
        %1308 = vmatpush2.xpose.msra.mxu0 0.0
        %1309 = vmatprep.subr.mxu0 0.0
        %1310 = vmatpush2.xpose.msra.mxu0 0.0
        %1311 = vmatprep.subr.mxu0 0.0
        %1312 = vmatpush2.xpose.msra.mxu0 0.0
        %1313 = vmatprep.subr.mxu0 0.0
        %1314 = vmatpush2.xpose.msra.mxu0 0.0
        %1315 = vmatprep.subr.mxu0 0.0
        %1316 = vmatpush2.xpose.msra.mxu0 0.0
        %1317 = vmatprep.subr.mxu0 0.0
        %1318 = vmatpush2.xpose.msra.mxu0 0.0
        %1319 = vmatprep.subr.mxu0 0.0
        %1320 = vmatpush2.xpose.msra.mxu0 0.0
        %1321 = vmatprep.mubr.f32.mxu0 0.0
        %1322 = vmatmul.mubr.f32.gmra.mxu0 %v1252
        %v1323 = vpop.f32.mrf.mxu0
        %v1324 = vadd.f32 0.0, %v1323
        %v1325 = vpop.f32.mrf.mxu0
        %1326 = vdwg.mxu0
        %v1327 = vld [vmem:[%s5] sm:$0xff]
        %v1328 = vld [vmem:[%s5 + $0x8] sm:$0xff]
        %v1329 = vld [vmem:[%s5 + $0x10] sm:$0xff]
        %v1330 = vld [vmem:[%s5 + $0x18] sm:$0xff]
        %1331 = vxpose.xlu0.b32.start [1/16] %v1096, 128
        %1332 = vxpose.xlu0.b32.cont [2/16] %v1172, 128
        %1333 = vxpose.xlu0.b32.cont [3/16] %v1248, 128
        %1334 = vxpose.xlu0.b32.cont [4/16] %v1324, 128
        %1335 = vxpose.xlu0.b32.cont [5/16] 0.0, 128
        %1336 = vxpose.xlu0.b32.cont [6/16] 0.0, 128
        %1337 = vxpose.xlu0.b32.cont [7/16] 0.0, 128
        %1338 = vxpose.xlu0.b32.cont [8/16] 0.0, 128
        %1339 = vxpose.xlu0.b32.cont [9/16] 0.0, 128
        %1340 = vxpose.xlu0.b32.cont [10/16] 0.0, 128
        %1341 = vxpose.xlu0.b32.cont [11/16] 0.0, 128
        %1342 = vxpose.xlu0.b32.cont [12/16] 0.0, 128
        %1343 = vxpose.xlu0.b32.cont [13/16] 0.0, 128
        %1344 = vxpose.xlu0.b32.cont [14/16] 0.0, 128
        %1345 = vxpose.xlu0.b32.cont [15/16] 0.0, 128
        %1346 = vxpose.xlu0.b32.end [16/16] 0.0, 128
        %v1347 = vpop.trf.xlu0
        %v1348 = vpop.trf.xlu0
        %v1349 = vpop.trf.xlu0
        %v1350 = vpop.trf.xlu0
        %v1351 = vpop.trf.xlu0
        %v1352 = vpop.trf.xlu0
        %v1353 = vpop.trf.xlu0
        %v1354 = vpop.trf.xlu0
        %v1355 = vpop.trf.xlu0
        %v1356 = vpop.trf.xlu0
        %v1357 = vpop.trf.xlu0
        %v1358 = vpop.trf.xlu0
        %v1359 = vpop.trf.xlu0
        %v1360 = vpop.trf.xlu0
        %v1361 = vpop.trf.xlu0
        %v1362 = vpop.trf.xlu0
        %v1364 = vsel %vm277, %v1347, 0
        %1366 = vmatprep.subr.mxu0 0.0
        %1367 = vmatpush1.msra.mxu0 0.0
        %1368 = vmatprep.subr.mxu0 0.0
        %1369 = vmatpush1.msra.mxu0 0.0
        %1370 = vmatprep.subr.mxu0 0.0
        %1371 = vmatpush1.msra.mxu0 0.0
        %1372 = vmatprep.subr.mxu0 0.0
        %1373 = vmatpush1.msra.mxu0 0.0
        %1374 = vmatprep.subr.mxu0 0.0
        %1375 = vmatpush1.msra.mxu0 0.0
        %1376 = vmatprep.subr.mxu0 0.0
        %1377 = vmatpush1.msra.mxu0 0.0
        %1378 = vmatprep.subr.mxu0 0.0
        %1379 = vmatpush1.msra.mxu0 0.0
        %1380 = vmatprep.subr.mxu0 0.0
        %1381 = vmatpush1.msra.mxu0 0.0
        %1382 = vmatprep.subr.mxu0 0.0
        %1383 = vmatpush1.msra.mxu0 0.0
        %1384 = vmatprep.subr.mxu0 0.0
        %1385 = vmatpush1.msra.mxu0 0.0
        %1386 = vmatprep.subr.mxu0 0.0
        %1387 = vmatpush1.msra.mxu0 0.0
        %1388 = vmatprep.subr.mxu0 0.0
        %1389 = vmatpush1.msra.mxu0 0.0
        %1390 = vmatprep.subr.mxu0 0.0
        %1391 = vmatpush1.msra.mxu0 %v1330
        %1392 = vmatprep.subr.mxu0 0.0
        %1393 = vmatpush1.msra.mxu0 %v1329
        %1394 = vmatprep.subr.mxu0 0.0
        %1395 = vmatpush1.msra.mxu0 %v1328
        %1396 = vmatprep.subr.mxu0 0.0
        %1397 = vmatpush1.msra.mxu0 %v1327
        %1398 = vmatprep.subr.mxu0 0.0
        %1399 = vmatpush2.msra.mxu0 0.0
        %1400 = vmatprep.subr.mxu0 0.0
        %1401 = vmatpush2.msra.mxu0 0.0
        %1402 = vmatprep.subr.mxu0 0.0
        %1403 = vmatpush2.msra.mxu0 0.0
        %1404 = vmatprep.subr.mxu0 0.0
        %1405 = vmatpush2.msra.mxu0 0.0
        %1406 = vmatprep.subr.mxu0 0.0
        %1407 = vmatpush2.msra.mxu0 0.0
        %1408 = vmatprep.subr.mxu0 0.0
        %1409 = vmatpush2.msra.mxu0 0.0
        %1410 = vmatprep.subr.mxu0 0.0
        %1411 = vmatpush2.msra.mxu0 0.0
        %1412 = vmatprep.subr.mxu0 0.0
        %1413 = vmatpush2.msra.mxu0 0.0
        %1414 = vmatprep.subr.mxu0 0.0
        %1415 = vmatpush2.msra.mxu0 0.0
        %1416 = vmatprep.subr.mxu0 0.0
        %1417 = vmatpush2.msra.mxu0 0.0
        %1418 = vmatprep.subr.mxu0 0.0
        %1419 = vmatpush2.msra.mxu0 0.0
        %1420 = vmatprep.subr.mxu0 0.0
        %1421 = vmatpush2.msra.mxu0 0.0
        %1422 = vmatprep.subr.mxu0 0.0
        %1423 = vmatpush2.msra.mxu0 0.0
        %1424 = vmatprep.subr.mxu0 0.0
        %1425 = vmatpush2.msra.mxu0 0.0
        %1426 = vmatprep.subr.mxu0 0.0
        %1427 = vmatpush2.msra.mxu0 0.0
        %1428 = vmatprep.subr.mxu0 0.0
        %1429 = vmatpush2.msra.mxu0 0.0
        %1430 = vmatprep.mubr.f32.mxu0 0.0
        %1431 = vmatmul.mubr.f32.gmra.mxu0 %v1364
        %v1432 = vpop.f32.mrf.mxu0
        %v1433 = vadd.f32 0.0, %v1432
        %v1434 = vpop.f32.mrf.mxu0
        %1435 = vdwg.mxu0
        %v1436 = vadd.f32 %v274, %v1433
        %v1437 = vld [vmem:[%s6] sm:$0x1]
        %v1439 = vlaneseq
        %v1440 = vshrl.u32 %v1439, 7
        %v1441 = vsub.s32 0, %v1440
        %v1442 = vrot.slane %v1437, %v1441
        %v1444 = vadd.f32 %v1436, %v1442
        %1445 = vst.msk [vmem:[%s269] sm:$0xff] %vm277, %v1444
        %s1446 = sand.u32 %s181, 1
        %s1447 = scalar_lea.sflag [#allocation3], %s1446
        %s1448 = sand.u32 %s181, 1
        %s1449 = smul.addr %s1448, 8
        %s1450 = scalar_lea.vmem [#allocation2], %s1449
        // Predicated region
        $region49: #{tpu_custom_call.1} parent=47 // pred_check
          %p1451 = pneg %p191
        $region50: #{tpu_custom_call.1} parent=47 // pred_check_branch
          %1453 = sbr.rel (%p1451) target = $region52
        $region51: #{tpu_custom_call.1} parent=47 // pred_region
          %s1455 = ssub.s32 128, 128
          %1456 = vsyncadd %s1447, %s1455
          %s1457 = smul.addr %s21, 128
          %s1458 = scalar_lea.hbm %s7, %s1457
          %s1460 = sshll.u32 %s1450, 4
          %s1461 = int_to_ptr.vmem [resolvable:$true] %s1460
          %1463 = dma.vmem_to_hbm [thread:$0]  %s1461, 128, %s1458, %s1447
        $region52: #{tpu_custom_call.1} parent=47 // pred_fallthru
          _
      $region48: #{tpu_custom_call.1} parent=5 // pred_fallthru
        _
      %p1464 = scmp.le.s32.totalorder 2, %s16
      // Predicated region
      $region53: #{tpu_custom_call.1} parent=5 // pred_check
        %p1465 = pneg %p1464
      $region54: #{tpu_custom_call.1} parent=5 // pred_check_branch
        %1467 = sbr.rel (%p1465) target = $region56
      $region55: #{tpu_custom_call.1} parent=5 // pred_region
        %s1468 = ssub.s32 %s16, 2
        // Predicated region
        $region57: #{tpu_custom_call.1} parent=55 // pred_check
          %p1469 = pneg %p197
        $region58: #{tpu_custom_call.1} parent=55 // pred_check_branch
          %1471 = sbr.rel (%p1469) target = $region60
        $region59: #{tpu_custom_call.1} parent=55 // pred_region
          %s1472 = sand.u32 %s182, 1
          %s1473 = scalar_lea.sflag [#allocation3], %s1472
          %s1474 = sand.u32 %s182, 1
          %s1475 = smul.addr %s1474, 8
          %s1476 = scalar_lea.vmem [#allocation2], %s1475
          %1477 = dma.done %s1473, 128
        $region60: #{tpu_custom_call.1} parent=55 // pred_fallthru
          _
      $region56: #{tpu_custom_call.1} parent=5 // pred_fallthru
        _
    $region6: #{tpu_custom_call.1} parent=1 // loop_footer
      %s20 = sadd.s32 1, %s16
    $region7: #{tpu_custom_call.1} parent=1 // loop_footer_branch
      %15 = sbr.rel target = $region3
    $region8: #{tpu_custom_call.1} parent=1 // loop_exit
      _
    %1478 = vsyncpa [#allocation3], 1
    %s1479 = scalar_lea.sflag [#allocation3], 1
    %1480 = vsyncpa %s1479, 1

</llo_original>
